<compile_context>
chip_gen: v5e
topology: v5e:2x2
jax: 0.10.0
libtpu: 0.0.40
codegen_flags: <defaults>
</compile_context>

<pallas_src>
import jax
import jax.numpy as jnp
import numpy as np
from jax import lax
from jax.experimental import pallas as pl
from jax.experimental.pallas import tpu as pltpu


def _round_up(x, m):
    return (x + m - 1) // m * m


# ----------------------------- Pallas kernel ------------------------------- #
def make_lstm_kernel(T, TB, Kp, Hp):
    H4 = 4 * Hp
    unroll = True if T <= 16 else 4   # full unroll for short sequences, factor-4 otherwise

    def kernel(x_ref, wih_ref, whh_ref, b_ref, fcw_ref, fcb_ref, out_ref,
               inbuf_ref, xproj_ref):
        layer = pl.program_id(1)

        # Layer 0 reads the (already padded, time-major) input sequence; later layers
        # read the hidden sequence the previous layer wrote into the same buffer.
        @pl.when(layer == 0)
        def _():
            inbuf_ref[...] = x_ref[...]

        # ---- hoisted input projection: one big MXU matmul per layer -------------
        # (T*TB, Kp) @ (Kp, 4Hp) + bias, done once, outside the latency-bound chain.
        xin = inbuf_ref[...].reshape(T * TB, Kp)
        xproj = jnp.dot(xin, wih_ref[...], preferred_element_type=jnp.float32) + b_ref[...]
        xproj_ref[...] = xproj.reshape(T, TB, H4)

        whh = whh_ref[...]   # (Hp, 4Hp), hoisted load

        # ---- serial recurrence: only h @ W_hh per step -------------------------
        # Gate layout is [i | f | o | g], each block Hp wide (multiple of 128 lanes),
        # so every slice below is lane-aligned; 2 transcendental launches per step.
        def step(t, carry):
            h, c = carry
            gates = xproj_ref[t] + jnp.dot(h, whh, preferred_element_type=jnp.float32)
            sig = jax.nn.sigmoid(gates[:, :3 * Hp])    # [i | f | o]
            g_g = jnp.tanh(gates[:, 3 * Hp:])          # [g]
            i_g = sig[:, :Hp]
            f_g = sig[:, Hp:2 * Hp]
            o_g = sig[:, 2 * Hp:]
            c = f_g * c + i_g * g_g
            h = o_g * jnp.tanh(c)
            # hidden sequence becomes the next layer's input
            if Kp == Hp:
                inbuf_ref[t] = h
            else:
                inbuf_ref[t, :, :Hp] = h
            return h, c

        h0 = jnp.zeros((TB, Hp), jnp.float32)
        c0 = jnp.zeros((TB, Hp), jnp.float32)
        h_last, _ = lax.fori_loop(0, T, step, (h0, c0), unroll=unroll)

        # ---- final FC on the last timestep of the last layer --------------------
        @pl.when(layer == pl.num_programs(1) - 1)
        def _():
            out = jnp.dot(h_last, fcw_ref[...],
                          preferred_element_type=jnp.float32) + fcb_ref[...]
            out_ref[...] = out.astype(out_ref.dtype)

    return kernel


# ------------------------------- wrapper ------------------------------------ #
def lstm_model_forward(x, params, *, batch_tile=8):
    """x: (batch, seq, input_size), batch-first like the PyTorch module."""
    B, T, Din = x.shape
    lstm_params = params["lstm"]
    L = len(lstm_params)
    H = lstm_params[0][1].shape[1]          # W_hh: (4H, H)
    Dout = params["fc_w"].shape[0]

    TB = batch_tile                          # f32 sublane quantum
    Bp = _round_up(max(B, TB), TB)           # padded batch
    Hp = _round_up(H, 128)                   # padded hidden (lane-aligned gates)
    Kp = max(_round_up(Din, 128), Hp)        # unified per-layer input width
    Doutp = _round_up(Dout, 128)             # lane-dense FC output

    # ---- pack & pad parameters (glue, plain JAX) ----------------------------
    def pack_w(w, in_dim, in_dim_p):
        # w: (4H, in_dim), PyTorch gate order [i, f, g, o] -> reorder to [i, f, o, g],
        # transpose each gate to (in_dim, H), pad to (in_dim_p, Hp), concat along lanes.
        blocks = []
        for g_idx in (0, 1, 3, 2):
            blk = w[g_idx * H:(g_idx + 1) * H, :].T
            blk = jnp.pad(blk, ((0, in_dim_p - in_dim), (0, Hp - H)))
            blocks.append(blk)
        return jnp.concatenate(blocks, axis=1)           # (in_dim_p, 4*Hp)

    def pack_b(b):
        blocks = [jnp.pad(b[g_idx * H:(g_idx + 1) * H], (0, Hp - H))
                  for g_idx in (0, 1, 3, 2)]
        return jnp.concatenate(blocks)[None, :]          # (1, 4*Hp)

    wih_all, whh_all, b_all = [], [], []
    for l, (w_ih, w_hh, b_ih, b_hh) in enumerate(lstm_params):
        in_l = Din if l == 0 else H
        wih_all.append(pack_w(w_ih, in_l, Kp))
        whh_all.append(pack_w(w_hh, H, Hp))
        b_all.append(pack_b(b_ih + b_hh))                # fused bias
    wih_all = jnp.stack(wih_all)                         # (L, Kp, 4Hp)
    whh_all = jnp.stack(whh_all)                         # (L, Hp, 4Hp)
    b_all = jnp.stack(b_all)                             # (L, 1, 4Hp)

    fc_w = jnp.pad(params["fc_w"].T, ((0, Hp - H), (0, Doutp - Dout)))   # (Hp, Doutp)
    fc_b = jnp.pad(params["fc_b"], (0, Doutp - Dout))[None, :]           # (1, Doutp)

    # time-major input, batch padded to sublane quantum, features padded lane-dense
    xt = jnp.transpose(x, (1, 0, 2)).astype(jnp.float32)                 # (T, B, Din)
    xt = jnp.pad(xt, ((0, 0), (0, Bp - B), (0, Kp - Din)))               # (T, Bp, Kp)

    kernel = make_lstm_kernel(T, TB, Kp, Hp)
    grid = (Bp // TB, L)                     # batch tiles (parallel) x layers (arbitrary)

    out_padded = pl.pallas_call(
        kernel,
        out_shape=jax.ShapeDtypeStruct((Bp, Doutp), jnp.float32),
        grid_spec=pltpu.PrefetchScalarGridSpec(
            num_scalar_prefetch=0,
            grid=grid,
            in_specs=[
                pl.BlockSpec((T, TB, Kp), lambda bt, l: (0, bt, 0)),          # x
                pl.BlockSpec((None, Kp, 4 * Hp), lambda bt, l: (l, 0, 0)),    # W_ih (per layer)
                pl.BlockSpec((None, Hp, 4 * Hp), lambda bt, l: (l, 0, 0)),    # W_hh (per layer)
                pl.BlockSpec((None, 1, 4 * Hp), lambda bt, l: (l, 0, 0)),     # bias (per layer)
                pl.BlockSpec((Hp, Doutp), lambda bt, l: (0, 0)),              # fc_w
                pl.BlockSpec((1, Doutp), lambda bt, l: (0, 0)),               # fc_b
            ],
            out_specs=pl.BlockSpec((TB, Doutp), lambda bt, l: (bt, 0)),
            scratch_shapes=[
                # layer input / hidden-sequence buffer and hoisted input projection.
                # (At real sizes these could be stored in bfloat16 on v6e/v7x to halve
                #  VMEM; kept f32 here for exact parity with the f32 reference.)
                pltpu.VMEM((T, TB, Kp), jnp.float32),
                pltpu.VMEM((T, TB, 4 * Hp), jnp.float32),
            ],
        ),
        compiler_params=pltpu.CompilerParams(
            dimension_semantics=("parallel", "arbitrary"),
            vmem_limit_bytes=32 * 1024 * 1024,
        ),
    )(xt, wih_all, whh_all, b_all, fc_w, fc_b)

    return out_padded[:B, :Dout].astype(x.dtype)


# ------------------------- pure-JAX reference ------------------------------ #
def lstm_model_ref(x, params):
    h_seq = x
    for (w_ih, w_hh, b_ih, b_hh) in params["lstm"]:
        B, T, _ = h_seq.shape
        H = w_hh.shape[1]
        h = jnp.zeros((B, H), jnp.float32)
        c = jnp.zeros((B, H), jnp.float32)
        outs = []
        for t in range(T):
            g = h_seq[:, t, :] @ w_ih.T + h @ w_hh.T + b_ih + b_hh
            i, f, gg, o = jnp.split(g, 4, axis=-1)
            i, f, gg, o = jax.nn.sigmoid(i), jax.nn.sigmoid(f), jnp.tanh(gg), jax.nn.sigmoid(o)
            c = f * c + i * gg
            h = o * jnp.tanh(c)
            outs.append(h)
        h_seq = jnp.stack(outs, axis=1)
    return h_seq[:, -1, :] @ params["fc_w"].T + params["fc_b"]


# ------------------------------- main --------------------------------------- #
def init_params(key, input_size, hidden_size, num_layers, output_size):
    # PyTorch default init: U(-1/sqrt(H), 1/sqrt(H)) for all LSTM params;
    # U(-1/sqrt(fan_in), 1/sqrt(fan_in)) for Linear.
    k_lstm = 1.0 / np.sqrt(hidden_size)
    params = {"lstm": []}
    for _ in range(num_layers):
        in_l = input_size if not params["lstm"] else hidden_size
        key, k1, k2, k3, k4 = jax.random.split(key, 5)
        params["lstm"].append((
            jax.random.uniform(k1, (4 * hidden_size, in_l), jnp.float32, -k_lstm, k_lstm),
            jax.random.uniform(k2, (4 * hidden_size, hidden_size), jnp.float32, -k_lstm, k_lstm),
            jax.random.uniform(k3, (4 * hidden_size,), jnp.float32, -k_lstm, k_lstm),
            jax.random.uniform(k4, (4 * hidden_size,), jnp.float32, -k_lstm, k_lstm),
        ))
    k_fc = 1.0 / np.sqrt(hidden_size)
    key, k1, k2 = jax.random.split(key, 3)
    params["fc_w"] = jax.random.uniform(k1, (output_size, hidden_size), jnp.float32, -k_fc, k_fc)
    params["fc_b"] = jax.random.uniform(k2, (output_size,), jnp.float32, -k_fc, k_fc)
    return params


if __name__ == "__main__":
    batch, seq_len = 2, 8
    input_size, hidden_size, num_layers, output_size = 16, 32, 2, 4

    key = jax.random.PRNGKey(0)
    key, kx, kp = jax.random.split(key, 3)
    x = jax.random.normal(kx, (batch, seq_len, input_size), jnp.float32)
    params = init_params(kp, input_size, hidden_size, num_layers, output_size)

    out = jax.block_until_ready(lstm_model_forward(x, params))
    ref = jax.block_until_ready(lstm_model_ref(x, params))

    assert out.shape == (batch, output_size)
    np.testing.assert_allclose(np.asarray(out), np.asarray(ref), atol=1e-5, rtol=1e-5)

    print("KERNEL_OK")
</pallas_src>

<mosaic_0001>
module attributes {stable_mosaic.version = 11 : i64} {
  func.func @kernel(%arg0: i32, %arg1: i32, %arg2: memref<8x8x128xf32, #tpu.memory_space<vmem>>, %arg3: memref<1x128x512xf32, #tpu.memory_space<vmem>>, %arg4: memref<1x128x512xf32, #tpu.memory_space<vmem>>, %arg5: memref<1x1x512xf32, #tpu.memory_space<vmem>>, %arg6: memref<128x128xf32, #tpu.memory_space<vmem>>, %arg7: memref<1x128xf32, #tpu.memory_space<vmem>>, %arg8: memref<8x128xf32, #tpu.memory_space<vmem>>, %arg9: memref<8x8x128xf32, #tpu.memory_space<vmem>>, %arg10: memref<8x8x512xf32, #tpu.memory_space<vmem>>) attributes {dimension_semantics = [#tpu.dimension_semantics<parallel>, #tpu.dimension_semantics<arbitrary>], iteration_bounds = array<i64: 1, 2>, scalar_prefetch = 0 : i64, scratch_operands = 2 : i64, tpu.core_type = #tpu.core_type<tc>, window_params = [{transform_indices = @transform_0, window_bounds = array<i64: 8, 8, 128>}, {transform_indices = @transform_1, window_bounds = array<i64: 1, 128, 512>}, {transform_indices = @transform_2, window_bounds = array<i64: 1, 128, 512>}, {transform_indices = @transform_3, window_bounds = array<i64: 1, 1, 512>}, {pipeline_mode = #tpu.pipeline_mode<synchronous>, transform_indices = @transform_4, window_bounds = array<i64: 128, 128>}, {pipeline_mode = #tpu.pipeline_mode<synchronous>, transform_indices = @transform_5, window_bounds = array<i64: 1, 128>}, {transform_indices = @transform_6, window_bounds = array<i64: 8, 128>}]} {
    %c0_i32 = arith.constant 0 : i32
    %0 = arith.cmpi eq, %arg1, %c0_i32 : i32
    %1 = arith.extui %0 : i1 to i32
    %c0_i32_0 = arith.constant 0 : i32
    %2 = arith.cmpi ne, %1, %c0_i32_0 : i32
    scf.if %2 {
      %c0_68 = arith.constant 0 : index
      %c0_69 = arith.constant 0 : index
      %c0_70 = arith.constant 0 : index
      %221 = vector.load %arg2[%c0_68, %c0_69, %c0_70] : memref<8x8x128xf32, #tpu.memory_space<vmem>>, vector<8x8x128xf32>
      %c0_71 = arith.constant 0 : index
      %c0_72 = arith.constant 0 : index
      %c0_73 = arith.constant 0 : index
      %222 = vector.load %arg9[%c0_71, %c0_72, %c0_73] : memref<8x8x128xf32, #tpu.memory_space<vmem>>, vector<8x8x128xf32>
      tpu.vector_store %arg9[%c0_71, %c0_72, %c0_73], %221 {strides = array<i32>} : memref<8x8x128xf32, #tpu.memory_space<vmem>>, vector<8x8x128xf32>,
    } else {
    }
    %c0 = arith.constant 0 : index
    %c0_1 = arith.constant 0 : index
    %c0_2 = arith.constant 0 : index
    %3 = vector.load %arg9[%c0, %c0_1, %c0_2] : memref<8x8x128xf32, #tpu.memory_space<vmem>>, vector<8x8x128xf32>
    %4 = vector.shape_cast %3 : vector<8x8x128xf32> to vector<64x128xf32>
    %c0_3 = arith.constant 0 : index
    %c0_4 = arith.constant 0 : index
    %c0_5 = arith.constant 0 : index
    %5 = vector.load %arg3[%c0_3, %c0_4, %c0_5] : memref<1x128x512xf32, #tpu.memory_space<vmem>>, vector<1x128x512xf32>
    %6 = vector.shape_cast %5 : vector<1x128x512xf32> to vector<128x512xf32>
    %cst = arith.constant dense<0.000000e+00> : vector<64x512xf32>
    %7 = tpu.matmul %4, %6, %cst {dimension_numbers = #tpu.dot_dimension_numbers<[1], [0], [0], [1], [0, 0, 1, 1], [], []>} : vector<64x128xf32>, vector<128x512xf32>, vector<64x512xf32> -> vector<64x512xf32>
    %c0_6 = arith.constant 0 : index
    %c0_7 = arith.constant 0 : index
    %c0_8 = arith.constant 0 : index
    %8 = vector.load %arg5[%c0_6, %c0_7, %c0_8] : memref<1x1x512xf32, #tpu.memory_space<vmem>>, vector<1x1x512xf32>
    %9 = vector.shape_cast %8 : vector<1x1x512xf32> to vector<1x512xf32>
    %10 = vector.broadcast %9 : vector<1x512xf32> to vector<64x512xf32>
    %11 = arith.addf %7, %10 : vector<64x512xf32>
    %12 = vector.shape_cast %11 : vector<64x512xf32> to vector<8x8x512xf32>
    %c0_9 = arith.constant 0 : index
    %c0_10 = arith.constant 0 : index
    %c0_11 = arith.constant 0 : index
    %13 = vector.load %arg10[%c0_9, %c0_10, %c0_11] : memref<8x8x512xf32, #tpu.memory_space<vmem>>, vector<8x8x512xf32>
    tpu.vector_store %arg10[%c0_9, %c0_10, %c0_11], %12 {strides = array<i32>} : memref<8x8x512xf32, #tpu.memory_space<vmem>>, vector<8x8x512xf32>,
    %c0_12 = arith.constant 0 : index
    %c0_13 = arith.constant 0 : index
    %c0_14 = arith.constant 0 : index
    %14 = vector.load %arg4[%c0_12, %c0_13, %c0_14] : memref<1x128x512xf32, #tpu.memory_space<vmem>>, vector<1x128x512xf32>
    %15 = vector.shape_cast %14 : vector<1x128x512xf32> to vector<128x512xf32>
    %cst_15 = arith.constant 0.000000e+00 : f32
    %16 = vector.broadcast %cst_15 : f32 to vector<8x128xf32>
    %cst_16 = arith.constant 0.000000e+00 : f32
    %17 = vector.broadcast %cst_16 : f32 to vector<8x128xf32>
    %c0_i32_17 = arith.constant 0 : i32
    %18 = arith.index_cast %c0_i32_17 : i32 to index
    %c0_18 = arith.constant 0 : index
    %c0_19 = arith.constant 0 : index
    %19 = vector.load %arg10[%18, %c0_18, %c0_19] : memref<8x8x512xf32, #tpu.memory_space<vmem>>, vector<1x8x512xf32>
    %20 = vector.shape_cast %19 : vector<1x8x512xf32> to vector<8x512xf32>
    %cst_20 = arith.constant dense<0.000000e+00> : vector<8x512xf32>
    %21 = tpu.matmul %16, %15, %cst_20 {dimension_numbers = #tpu.dot_dimension_numbers<[1], [0], [0], [1], [0, 0, 1, 1], [], []>} : vector<8x128xf32>, vector<128x512xf32>, vector<8x512xf32> -> vector<8x512xf32>
    %22 = arith.addf %20, %21 : vector<8x512xf32>
    %23 = vector.extract_strided_slice %22 {offsets = [0, 0], sizes = [8, 384], strides = [1, 1]} : vector<8x512xf32> to vector<8x384xf32>
    %24 = arith.negf %23 : vector<8x384xf32>
    %25 = math.exp %24 : vector<8x384xf32>
    %cst_21 = arith.constant 1.000000e+00 : f32
    %26 = vector.broadcast %cst_21 : f32 to vector<8x384xf32>
    %27 = arith.addf %26, %25 : vector<8x384xf32>
    %28 = arith.divf %26, %27 : vector<8x384xf32>
    %29 = vector.extract_strided_slice %22 {offsets = [0, 384], sizes = [8, 128], strides = [1, 1]} : vector<8x512xf32> to vector<8x128xf32>
    %30 = math.tanh %29 : vector<8x128xf32>
    %31 = vector.extract_strided_slice %28 {offsets = [0, 0], sizes = [8, 128], strides = [1, 1]} : vector<8x384xf32> to vector<8x128xf32>
    %32 = vector.extract_strided_slice %28 {offsets = [0, 128], sizes = [8, 128], strides = [1, 1]} : vector<8x384xf32> to vector<8x128xf32>
    %33 = vector.extract_strided_slice %28 {offsets = [0, 256], sizes = [8, 128], strides = [1, 1]} : vector<8x384xf32> to vector<8x128xf32>
    %34 = arith.mulf %32, %17 : vector<8x128xf32>
    %35 = arith.mulf %31, %30 : vector<8x128xf32>
    %36 = arith.addf %34, %35 : vector<8x128xf32>
    %37 = math.tanh %36 : vector<8x128xf32>
    %38 = arith.mulf %33, %37 : vector<8x128xf32>
    %39 = arith.index_cast %c0_i32_17 : i32 to index
    %c0_22 = arith.constant 0 : index
    %c0_23 = arith.constant 0 : index
    %40 = vector.load %arg9[%39, %c0_22, %c0_23] : memref<8x8x128xf32, #tpu.memory_space<vmem>>, vector<1x8x128xf32>
    %41 = vector.shape_cast %40 : vector<1x8x128xf32> to vector<8x128xf32>
    %42 = vector.shape_cast %38 : vector<8x128xf32> to vector<1x8x128xf32>
    tpu.vector_store %arg9[%39, %c0_22, %c0_23], %42 {strides = array<i32>} : memref<8x8x128xf32, #tpu.memory_space<vmem>>, vector<1x8x128xf32>,
    %c1_i32 = arith.constant 1 : i32
    %43 = arith.index_cast %c1_i32 : i32 to index
    %c0_24 = arith.constant 0 : index
    %c0_25 = arith.constant 0 : index
    %44 = vector.load %arg10[%43, %c0_24, %c0_25] : memref<8x8x512xf32, #tpu.memory_space<vmem>>, vector<1x8x512xf32>
    %45 = vector.shape_cast %44 : vector<1x8x512xf32> to vector<8x512xf32>
    %cst_26 = arith.constant dense<0.000000e+00> : vector<8x512xf32>
    %46 = tpu.matmul %38, %15, %cst_26 {dimension_numbers = #tpu.dot_dimension_numbers<[1], [0], [0], [1], [0, 0, 1, 1], [], []>} : vector<8x128xf32>, vector<128x512xf32>, vector<8x512xf32> -> vector<8x512xf32>
    %47 = arith.addf %45, %46 : vector<8x512xf32>
    %48 = vector.extract_strided_slice %47 {offsets = [0, 0], sizes = [8, 384], strides = [1, 1]} : vector<8x512xf32> to vector<8x384xf32>
    %49 = arith.negf %48 : vector<8x384xf32>
    %50 = math.exp %49 : vector<8x384xf32>
    %cst_27 = arith.constant 1.000000e+00 : f32
    %51 = vector.broadcast %cst_27 : f32 to vector<8x384xf32>
    %52 = arith.addf %51, %50 : vector<8x384xf32>
    %53 = arith.divf %51, %52 : vector<8x384xf32>
    %54 = vector.extract_strided_slice %47 {offsets = [0, 384], sizes = [8, 128], strides = [1, 1]} : vector<8x512xf32> to vector<8x128xf32>
    %55 = math.tanh %54 : vector<8x128xf32>
    %56 = vector.extract_strided_slice %53 {offsets = [0, 0], sizes = [8, 128], strides = [1, 1]} : vector<8x384xf32> to vector<8x128xf32>
    %57 = vector.extract_strided_slice %53 {offsets = [0, 128], sizes = [8, 128], strides = [1, 1]} : vector<8x384xf32> to vector<8x128xf32>
    %58 = vector.extract_strided_slice %53 {offsets = [0, 256], sizes = [8, 128], strides = [1, 1]} : vector<8x384xf32> to vector<8x128xf32>
    %59 = arith.mulf %57, %36 : vector<8x128xf32>
    %60 = arith.mulf %56, %55 : vector<8x128xf32>
    %61 = arith.addf %59, %60 : vector<8x128xf32>
    %62 = math.tanh %61 : vector<8x128xf32>
    %63 = arith.mulf %58, %62 : vector<8x128xf32>
    %64 = arith.index_cast %c1_i32 : i32 to index
    %c0_28 = arith.constant 0 : index
    %c0_29 = arith.constant 0 : index
    %65 = vector.load %arg9[%64, %c0_28, %c0_29] : memref<8x8x128xf32, #tpu.memory_space<vmem>>, vector<1x8x128xf32>
    %66 = vector.shape_cast %65 : vector<1x8x128xf32> to vector<8x128xf32>
    %67 = vector.shape_cast %63 : vector<8x128xf32> to vector<1x8x128xf32>
    tpu.vector_store %arg9[%64, %c0_28, %c0_29], %67 {strides = array<i32>} : memref<8x8x128xf32, #tpu.memory_space<vmem>>, vector<1x8x128xf32>,
    %c2_i32 = arith.constant 2 : i32
    %68 = arith.index_cast %c2_i32 : i32 to index
    %c0_30 = arith.constant 0 : index
    %c0_31 = arith.constant 0 : index
    %69 = vector.load %arg10[%68, %c0_30, %c0_31] : memref<8x8x512xf32, #tpu.memory_space<vmem>>, vector<1x8x512xf32>
    %70 = vector.shape_cast %69 : vector<1x8x512xf32> to vector<8x512xf32>
    %cst_32 = arith.constant dense<0.000000e+00> : vector<8x512xf32>
    %71 = tpu.matmul %63, %15, %cst_32 {dimension_numbers = #tpu.dot_dimension_numbers<[1], [0], [0], [1], [0, 0, 1, 1], [], []>} : vector<8x128xf32>, vector<128x512xf32>, vector<8x512xf32> -> vector<8x512xf32>
    %72 = arith.addf %70, %71 : vector<8x512xf32>
    %73 = vector.extract_strided_slice %72 {offsets = [0, 0], sizes = [8, 384], strides = [1, 1]} : vector<8x512xf32> to vector<8x384xf32>
    %74 = arith.negf %73 : vector<8x384xf32>
    %75 = math.exp %74 : vector<8x384xf32>
    %cst_33 = arith.constant 1.000000e+00 : f32
    %76 = vector.broadcast %cst_33 : f32 to vector<8x384xf32>
    %77 = arith.addf %76, %75 : vector<8x384xf32>
    %78 = arith.divf %76, %77 : vector<8x384xf32>
    %79 = vector.extract_strided_slice %72 {offsets = [0, 384], sizes = [8, 128], strides = [1, 1]} : vector<8x512xf32> to vector<8x128xf32>
    %80 = math.tanh %79 : vector<8x128xf32>
    %81 = vector.extract_strided_slice %78 {offsets = [0, 0], sizes = [8, 128], strides = [1, 1]} : vector<8x384xf32> to vector<8x128xf32>
    %82 = vector.extract_strided_slice %78 {offsets = [0, 128], sizes = [8, 128], strides = [1, 1]} : vector<8x384xf32> to vector<8x128xf32>
    %83 = vector.extract_strided_slice %78 {offsets = [0, 256], sizes = [8, 128], strides = [1, 1]} : vector<8x384xf32> to vector<8x128xf32>
    %84 = arith.mulf %82, %61 : vector<8x128xf32>
    %85 = arith.mulf %81, %80 : vector<8x128xf32>
    %86 = arith.addf %84, %85 : vector<8x128xf32>
    %87 = math.tanh %86 : vector<8x128xf32>
    %88 = arith.mulf %83, %87 : vector<8x128xf32>
    %89 = arith.index_cast %c2_i32 : i32 to index
    %c0_34 = arith.constant 0 : index
    %c0_35 = arith.constant 0 : index
    %90 = vector.load %arg9[%89, %c0_34, %c0_35] : memref<8x8x128xf32, #tpu.memory_space<vmem>>, vector<1x8x128xf32>
    %91 = vector.shape_cast %90 : vector<1x8x128xf32> to vector<8x128xf32>
    %92 = vector.shape_cast %88 : vector<8x128xf32> to vector<1x8x128xf32>
    tpu.vector_store %arg9[%89, %c0_34, %c0_35], %92 {strides = array<i32>} : memref<8x8x128xf32, #tpu.memory_space<vmem>>, vector<1x8x128xf32>,
    %c3_i32 = arith.constant 3 : i32
    %93 = arith.index_cast %c3_i32 : i32 to index
    %c0_36 = arith.constant 0 : index
    %c0_37 = arith.constant 0 : index
    %94 = vector.load %arg10[%93, %c0_36, %c0_37] : memref<8x8x512xf32, #tpu.memory_space<vmem>>, vector<1x8x512xf32>
    %95 = vector.shape_cast %94 : vector<1x8x512xf32> to vector<8x512xf32>
    %cst_38 = arith.constant dense<0.000000e+00> : vector<8x512xf32>
    %96 = tpu.matmul %88, %15, %cst_38 {dimension_numbers = #tpu.dot_dimension_numbers<[1], [0], [0], [1], [0, 0, 1, 1], [], []>} : vector<8x128xf32>, vector<128x512xf32>, vector<8x512xf32> -> vector<8x512xf32>
    %97 = arith.addf %95, %96 : vector<8x512xf32>
    %98 = vector.extract_strided_slice %97 {offsets = [0, 0], sizes = [8, 384], strides = [1, 1]} : vector<8x512xf32> to vector<8x384xf32>
    %99 = arith.negf %98 : vector<8x384xf32>
    %100 = math.exp %99 : vector<8x384xf32>
    %cst_39 = arith.constant 1.000000e+00 : f32
    %101 = vector.broadcast %cst_39 : f32 to vector<8x384xf32>
    %102 = arith.addf %101, %100 : vector<8x384xf32>
    %103 = arith.divf %101, %102 : vector<8x384xf32>
    %104 = vector.extract_strided_slice %97 {offsets = [0, 384], sizes = [8, 128], strides = [1, 1]} : vector<8x512xf32> to vector<8x128xf32>
    %105 = math.tanh %104 : vector<8x128xf32>
    %106 = vector.extract_strided_slice %103 {offsets = [0, 0], sizes = [8, 128], strides = [1, 1]} : vector<8x384xf32> to vector<8x128xf32>
    %107 = vector.extract_strided_slice %103 {offsets = [0, 128], sizes = [8, 128], strides = [1, 1]} : vector<8x384xf32> to vector<8x128xf32>
    %108 = vector.extract_strided_slice %103 {offsets = [0, 256], sizes = [8, 128], strides = [1, 1]} : vector<8x384xf32> to vector<8x128xf32>
    %109 = arith.mulf %107, %86 : vector<8x128xf32>
    %110 = arith.mulf %106, %105 : vector<8x128xf32>
    %111 = arith.addf %109, %110 : vector<8x128xf32>
    %112 = math.tanh %111 : vector<8x128xf32>
    %113 = arith.mulf %108, %112 : vector<8x128xf32>
    %114 = arith.index_cast %c3_i32 : i32 to index
    %c0_40 = arith.constant 0 : index
    %c0_41 = arith.constant 0 : index
    %115 = vector.load %arg9[%114, %c0_40, %c0_41] : memref<8x8x128xf32, #tpu.memory_space<vmem>>, vector<1x8x128xf32>
    %116 = vector.shape_cast %115 : vector<1x8x128xf32> to vector<8x128xf32>
    %117 = vector.shape_cast %113 : vector<8x128xf32> to vector<1x8x128xf32>
    tpu.vector_store %arg9[%114, %c0_40, %c0_41], %117 {strides = array<i32>} : memref<8x8x128xf32, #tpu.memory_space<vmem>>, vector<1x8x128xf32>,
    %c4_i32 = arith.constant 4 : i32
    %118 = arith.index_cast %c4_i32 : i32 to index
    %c0_42 = arith.constant 0 : index
    %c0_43 = arith.constant 0 : index
    %119 = vector.load %arg10[%118, %c0_42, %c0_43] : memref<8x8x512xf32, #tpu.memory_space<vmem>>, vector<1x8x512xf32>
    %120 = vector.shape_cast %119 : vector<1x8x512xf32> to vector<8x512xf32>
    %cst_44 = arith.constant dense<0.000000e+00> : vector<8x512xf32>
    %121 = tpu.matmul %113, %15, %cst_44 {dimension_numbers = #tpu.dot_dimension_numbers<[1], [0], [0], [1], [0, 0, 1, 1], [], []>} : vector<8x128xf32>, vector<128x512xf32>, vector<8x512xf32> -> vector<8x512xf32>
    %122 = arith.addf %120, %121 : vector<8x512xf32>
    %123 = vector.extract_strided_slice %122 {offsets = [0, 0], sizes = [8, 384], strides = [1, 1]} : vector<8x512xf32> to vector<8x384xf32>
    %124 = arith.negf %123 : vector<8x384xf32>
    %125 = math.exp %124 : vector<8x384xf32>
    %cst_45 = arith.constant 1.000000e+00 : f32
    %126 = vector.broadcast %cst_45 : f32 to vector<8x384xf32>
    %127 = arith.addf %126, %125 : vector<8x384xf32>
    %128 = arith.divf %126, %127 : vector<8x384xf32>
    %129 = vector.extract_strided_slice %122 {offsets = [0, 384], sizes = [8, 128], strides = [1, 1]} : vector<8x512xf32> to vector<8x128xf32>
    %130 = math.tanh %129 : vector<8x128xf32>
    %131 = vector.extract_strided_slice %128 {offsets = [0, 0], sizes = [8, 128], strides = [1, 1]} : vector<8x384xf32> to vector<8x128xf32>
    %132 = vector.extract_strided_slice %128 {offsets = [0, 128], sizes = [8, 128], strides = [1, 1]} : vector<8x384xf32> to vector<8x128xf32>
    %133 = vector.extract_strided_slice %128 {offsets = [0, 256], sizes = [8, 128], strides = [1, 1]} : vector<8x384xf32> to vector<8x128xf32>
    %134 = arith.mulf %132, %111 : vector<8x128xf32>
    %135 = arith.mulf %131, %130 : vector<8x128xf32>
    %136 = arith.addf %134, %135 : vector<8x128xf32>
    %137 = math.tanh %136 : vector<8x128xf32>
    %138 = arith.mulf %133, %137 : vector<8x128xf32>
    %139 = arith.index_cast %c4_i32 : i32 to index
    %c0_46 = arith.constant 0 : index
    %c0_47 = arith.constant 0 : index
    %140 = vector.load %arg9[%139, %c0_46, %c0_47] : memref<8x8x128xf32, #tpu.memory_space<vmem>>, vector<1x8x128xf32>
    %141 = vector.shape_cast %140 : vector<1x8x128xf32> to vector<8x128xf32>
    %142 = vector.shape_cast %138 : vector<8x128xf32> to vector<1x8x128xf32>
    tpu.vector_store %arg9[%139, %c0_46, %c0_47], %142 {strides = array<i32>} : memref<8x8x128xf32, #tpu.memory_space<vmem>>, vector<1x8x128xf32>,
    %c5_i32 = arith.constant 5 : i32
    %143 = arith.index_cast %c5_i32 : i32 to index
    %c0_48 = arith.constant 0 : index
    %c0_49 = arith.constant 0 : index
    %144 = vector.load %arg10[%143, %c0_48, %c0_49] : memref<8x8x512xf32, #tpu.memory_space<vmem>>, vector<1x8x512xf32>
    %145 = vector.shape_cast %144 : vector<1x8x512xf32> to vector<8x512xf32>
    %cst_50 = arith.constant dense<0.000000e+00> : vector<8x512xf32>
    %146 = tpu.matmul %138, %15, %cst_50 {dimension_numbers = #tpu.dot_dimension_numbers<[1], [0], [0], [1], [0, 0, 1, 1], [], []>} : vector<8x128xf32>, vector<128x512xf32>, vector<8x512xf32> -> vector<8x512xf32>
    %147 = arith.addf %145, %146 : vector<8x512xf32>
    %148 = vector.extract_strided_slice %147 {offsets = [0, 0], sizes = [8, 384], strides = [1, 1]} : vector<8x512xf32> to vector<8x384xf32>
    %149 = arith.negf %148 : vector<8x384xf32>
    %150 = math.exp %149 : vector<8x384xf32>
    %cst_51 = arith.constant 1.000000e+00 : f32
    %151 = vector.broadcast %cst_51 : f32 to vector<8x384xf32>
    %152 = arith.addf %151, %150 : vector<8x384xf32>
    %153 = arith.divf %151, %152 : vector<8x384xf32>
    %154 = vector.extract_strided_slice %147 {offsets = [0, 384], sizes = [8, 128], strides = [1, 1]} : vector<8x512xf32> to vector<8x128xf32>
    %155 = math.tanh %154 : vector<8x128xf32>
    %156 = vector.extract_strided_slice %153 {offsets = [0, 0], sizes = [8, 128], strides = [1, 1]} : vector<8x384xf32> to vector<8x128xf32>
    %157 = vector.extract_strided_slice %153 {offsets = [0, 128], sizes = [8, 128], strides = [1, 1]} : vector<8x384xf32> to vector<8x128xf32>
    %158 = vector.extract_strided_slice %153 {offsets = [0, 256], sizes = [8, 128], strides = [1, 1]} : vector<8x384xf32> to vector<8x128xf32>
    %159 = arith.mulf %157, %136 : vector<8x128xf32>
    %160 = arith.mulf %156, %155 : vector<8x128xf32>
    %161 = arith.addf %159, %160 : vector<8x128xf32>
    %162 = math.tanh %161 : vector<8x128xf32>
    %163 = arith.mulf %158, %162 : vector<8x128xf32>
    %164 = arith.index_cast %c5_i32 : i32 to index
    %c0_52 = arith.constant 0 : index
    %c0_53 = arith.constant 0 : index
    %165 = vector.load %arg9[%164, %c0_52, %c0_53] : memref<8x8x128xf32, #tpu.memory_space<vmem>>, vector<1x8x128xf32>
    %166 = vector.shape_cast %165 : vector<1x8x128xf32> to vector<8x128xf32>
    %167 = vector.shape_cast %163 : vector<8x128xf32> to vector<1x8x128xf32>
    tpu.vector_store %arg9[%164, %c0_52, %c0_53], %167 {strides = array<i32>} : memref<8x8x128xf32, #tpu.memory_space<vmem>>, vector<1x8x128xf32>,
    %c6_i32 = arith.constant 6 : i32
    %168 = arith.index_cast %c6_i32 : i32 to index
    %c0_54 = arith.constant 0 : index
    %c0_55 = arith.constant 0 : index
    %169 = vector.load %arg10[%168, %c0_54, %c0_55] : memref<8x8x512xf32, #tpu.memory_space<vmem>>, vector<1x8x512xf32>
    %170 = vector.shape_cast %169 : vector<1x8x512xf32> to vector<8x512xf32>
    %cst_56 = arith.constant dense<0.000000e+00> : vector<8x512xf32>
    %171 = tpu.matmul %163, %15, %cst_56 {dimension_numbers = #tpu.dot_dimension_numbers<[1], [0], [0], [1], [0, 0, 1, 1], [], []>} : vector<8x128xf32>, vector<128x512xf32>, vector<8x512xf32> -> vector<8x512xf32>
    %172 = arith.addf %170, %171 : vector<8x512xf32>
    %173 = vector.extract_strided_slice %172 {offsets = [0, 0], sizes = [8, 384], strides = [1, 1]} : vector<8x512xf32> to vector<8x384xf32>
    %174 = arith.negf %173 : vector<8x384xf32>
    %175 = math.exp %174 : vector<8x384xf32>
    %cst_57 = arith.constant 1.000000e+00 : f32
    %176 = vector.broadcast %cst_57 : f32 to vector<8x384xf32>
    %177 = arith.addf %176, %175 : vector<8x384xf32>
    %178 = arith.divf %176, %177 : vector<8x384xf32>
    %179 = vector.extract_strided_slice %172 {offsets = [0, 384], sizes = [8, 128], strides = [1, 1]} : vector<8x512xf32> to vector<8x128xf32>
    %180 = math.tanh %179 : vector<8x128xf32>
    %181 = vector.extract_strided_slice %178 {offsets = [0, 0], sizes = [8, 128], strides = [1, 1]} : vector<8x384xf32> to vector<8x128xf32>
    %182 = vector.extract_strided_slice %178 {offsets = [0, 128], sizes = [8, 128], strides = [1, 1]} : vector<8x384xf32> to vector<8x128xf32>
    %183 = vector.extract_strided_slice %178 {offsets = [0, 256], sizes = [8, 128], strides = [1, 1]} : vector<8x384xf32> to vector<8x128xf32>
    %184 = arith.mulf %182, %161 : vector<8x128xf32>
    %185 = arith.mulf %181, %180 : vector<8x128xf32>
    %186 = arith.addf %184, %185 : vector<8x128xf32>
    %187 = math.tanh %186 : vector<8x128xf32>
    %188 = arith.mulf %183, %187 : vector<8x128xf32>
    %189 = arith.index_cast %c6_i32 : i32 to index
    %c0_58 = arith.constant 0 : index
    %c0_59 = arith.constant 0 : index
    %190 = vector.load %arg9[%189, %c0_58, %c0_59] : memref<8x8x128xf32, #tpu.memory_space<vmem>>, vector<1x8x128xf32>
    %191 = vector.shape_cast %190 : vector<1x8x128xf32> to vector<8x128xf32>
    %192 = vector.shape_cast %188 : vector<8x128xf32> to vector<1x8x128xf32>
    tpu.vector_store %arg9[%189, %c0_58, %c0_59], %192 {strides = array<i32>} : memref<8x8x128xf32, #tpu.memory_space<vmem>>, vector<1x8x128xf32>,
    %c7_i32 = arith.constant 7 : i32
    %193 = arith.index_cast %c7_i32 : i32 to index
    %c0_60 = arith.constant 0 : index
    %c0_61 = arith.constant 0 : index
    %194 = vector.load %arg10[%193, %c0_60, %c0_61] : memref<8x8x512xf32, #tpu.memory_space<vmem>>, vector<1x8x512xf32>
    %195 = vector.shape_cast %194 : vector<1x8x512xf32> to vector<8x512xf32>
    %cst_62 = arith.constant dense<0.000000e+00> : vector<8x512xf32>
    %196 = tpu.matmul %188, %15, %cst_62 {dimension_numbers = #tpu.dot_dimension_numbers<[1], [0], [0], [1], [0, 0, 1, 1], [], []>} : vector<8x128xf32>, vector<128x512xf32>, vector<8x512xf32> -> vector<8x512xf32>
    %197 = arith.addf %195, %196 : vector<8x512xf32>
    %198 = vector.extract_strided_slice %197 {offsets = [0, 0], sizes = [8, 384], strides = [1, 1]} : vector<8x512xf32> to vector<8x384xf32>
    %199 = arith.negf %198 : vector<8x384xf32>
    %200 = math.exp %199 : vector<8x384xf32>
    %cst_63 = arith.constant 1.000000e+00 : f32
    %201 = vector.broadcast %cst_63 : f32 to vector<8x384xf32>
    %202 = arith.addf %201, %200 : vector<8x384xf32>
    %203 = arith.divf %201, %202 : vector<8x384xf32>
    %204 = vector.extract_strided_slice %197 {offsets = [0, 384], sizes = [8, 128], strides = [1, 1]} : vector<8x512xf32> to vector<8x128xf32>
    %205 = math.tanh %204 : vector<8x128xf32>
    %206 = vector.extract_strided_slice %203 {offsets = [0, 0], sizes = [8, 128], strides = [1, 1]} : vector<8x384xf32> to vector<8x128xf32>
    %207 = vector.extract_strided_slice %203 {offsets = [0, 128], sizes = [8, 128], strides = [1, 1]} : vector<8x384xf32> to vector<8x128xf32>
    %208 = vector.extract_strided_slice %203 {offsets = [0, 256], sizes = [8, 128], strides = [1, 1]} : vector<8x384xf32> to vector<8x128xf32>
    %209 = arith.mulf %207, %186 : vector<8x128xf32>
    %210 = arith.mulf %206, %205 : vector<8x128xf32>
    %211 = arith.addf %209, %210 : vector<8x128xf32>
    %212 = math.tanh %211 : vector<8x128xf32>
    %213 = arith.mulf %208, %212 : vector<8x128xf32>
    %214 = arith.index_cast %c7_i32 : i32 to index
    %c0_64 = arith.constant 0 : index
    %c0_65 = arith.constant 0 : index
    %215 = vector.load %arg9[%214, %c0_64, %c0_65] : memref<8x8x128xf32, #tpu.memory_space<vmem>>, vector<1x8x128xf32>
    %216 = vector.shape_cast %215 : vector<1x8x128xf32> to vector<8x128xf32>
    %217 = vector.shape_cast %213 : vector<8x128xf32> to vector<1x8x128xf32>
    tpu.vector_store %arg9[%214, %c0_64, %c0_65], %217 {strides = array<i32>} : memref<8x8x128xf32, #tpu.memory_space<vmem>>, vector<1x8x128xf32>,
    %c8_i32 = arith.constant 8 : i32
    %c1_i32_66 = arith.constant 1 : i32
    %218 = arith.cmpi eq, %arg1, %c1_i32_66 : i32
    %219 = arith.extui %218 : i1 to i32
    %c0_i32_67 = arith.constant 0 : i32
    %220 = arith.cmpi ne, %219, %c0_i32_67 : i32
    scf.if %220 {
      %c0_68 = arith.constant 0 : index
      %c0_69 = arith.constant 0 : index
      %221 = vector.load %arg6[%c0_68, %c0_69] : memref<128x128xf32, #tpu.memory_space<vmem>>, vector<128x128xf32>
      %cst_70 = arith.constant dense<0.000000e+00> : vector<8x128xf32>
      %222 = tpu.matmul %213, %221, %cst_70 {dimension_numbers = #tpu.dot_dimension_numbers<[1], [0], [0], [1], [0, 0, 1, 1], [], []>} : vector<8x128xf32>, vector<128x128xf32>, vector<8x128xf32> -> vector<8x128xf32>
      %c0_71 = arith.constant 0 : index
      %c0_72 = arith.constant 0 : index
      %223 = vector.load %arg7[%c0_71, %c0_72] : memref<1x128xf32, #tpu.memory_space<vmem>>, vector<1x128xf32>
      %224 = vector.broadcast %223 : vector<1x128xf32> to vector<8x128xf32>
      %225 = arith.addf %222, %224 : vector<8x128xf32>
      %c0_73 = arith.constant 0 : index
      %c0_74 = arith.constant 0 : index
      %226 = vector.load %arg8[%c0_73, %c0_74] : memref<8x128xf32, #tpu.memory_space<vmem>>, vector<8x128xf32>
      tpu.vector_store %arg8[%c0_73, %c0_74], %225 {strides = array<i32>} : memref<8x128xf32, #tpu.memory_space<vmem>>, vector<8x128xf32>,
    } else {
    }
    return
  }
  func.func @transform_0(%arg0: i32, %arg1: i32) -> (i32, i32, i32) {
    %c0_i32 = arith.constant 0 : i32
    %c0_i32_0 = arith.constant 0 : i32
    %c0_i32_1 = arith.constant 0 : i32
    return %c0_i32, %arg0, %c0_i32_0 : i32, i32, i32
  }
  func.func @transform_1(%arg0: i32, %arg1: i32) -> (i32, i32, i32) {
    %c0_i32 = arith.constant 0 : i32
    %c0_i32_0 = arith.constant 0 : i32
    %c0_i32_1 = arith.constant 0 : i32
    return %arg1, %c0_i32, %c0_i32_0 : i32, i32, i32
  }
  func.func @transform_2(%arg0: i32, %arg1: i32) -> (i32, i32, i32) {
    %c0_i32 = arith.constant 0 : i32
    %c0_i32_0 = arith.constant 0 : i32
    %c0_i32_1 = arith.constant 0 : i32
    return %arg1, %c0_i32, %c0_i32_0 : i32, i32, i32
  }
  func.func @transform_3(%arg0: i32, %arg1: i32) -> (i32, i32, i32) {
    %c0_i32 = arith.constant 0 : i32
    %c0_i32_0 = arith.constant 0 : i32
    %c0_i32_1 = arith.constant 0 : i32
    return %arg1, %c0_i32, %c0_i32_0 : i32, i32, i32
  }
  func.func @transform_4(%arg0: i32, %arg1: i32) -> (i32, i32) {
    %c0_i32 = arith.constant 0 : i32
    %c0_i32_0 = arith.constant 0 : i32
    %c0_i32_1 = arith.constant 0 : i32
    return %c0_i32, %c0_i32_0 : i32, i32
  }
  func.func @transform_5(%arg0: i32, %arg1: i32) -> (i32, i32) {
    %c0_i32 = arith.constant 0 : i32
    %c0_i32_0 = arith.constant 0 : i32
    %c0_i32_1 = arith.constant 0 : i32
    return %c0_i32, %c0_i32_0 : i32, i32
  }
  func.func @transform_6(%arg0: i32, %arg1: i32) -> (i32, i32) {
    %c0_i32 = arith.constant 0 : i32
    %c0_i32_0 = arith.constant 0 : i32
    return %arg0, %c0_i32 : i32, i32
  }
}

</mosaic_0001>

<llo_original>
// kernel: tpu_custom_call.1
$region0: #{tpu_custom_call.1}
  #allocation0 [shape = 'u32[]', space=smem, size = 0x4, offset = 0x4, fixed_abs, tag = 'smem constant byte address 0x4 - core index']
  #allocation1 [shape = 'u32[72,128]{1,0:T(1,128)}', space=vmem, size = 0x9000, scoped, tag = 'internal scratch']
  #allocation2 [shape = 'f32[8,8,128]{2,1,0:T(8,128)}', space=vmem, size = 0x8000, scoped, tag = 'scratch operand']
  #allocation3 [shape = 'f32[8,8,512]{2,1,0:T(8,128)}', space=vmem, size = 0x20000, scoped, tag = 'scratch operand']
  %s0 = inlined_call_operand.hbm [shape: f32[8,8,128], index: 0, kind: input, shape index: {}]
  %s1 = inlined_call_operand.hbm [shape: f32[2,128,512], index: 1, kind: input, shape index: {}]
  %s2 = inlined_call_operand.hbm [shape: f32[2,128,512], index: 2, kind: input, shape index: {}]
  %s3 = inlined_call_operand.hbm [shape: f32[2,1,512], index: 3, kind: input, shape index: {}]
  %s4 = inlined_call_operand.hbm [shape: f32[128,128], index: 4, kind: input, shape index: {}]
  %s5 = inlined_call_operand.vmem [shape: f32[1,128], index: 5, kind: input, shape index: {}]
  %s6 = inlined_call_operand.hbm [shape: f32[8,128], index: 6, kind: output, shape index: {}]
  %s7 = sld [smem:[#allocation0]]
  $region85: #{tpu_custom_call.1} parent=0
    _
  %s9 = ssub.s32 1, %s7
  %s10 = scalar_select 0, %s9, %s7
  $region1: #{tpu_custom_call.1} parent=0
    #allocation4 [shape = 'u8[32768]{0}', space=vmem, size = 0x8000, scoped, tag = 'input window, operand 0, single buffered']
    #allocation5 [shape = 's32[2]{0}', space=sflag, size = 0x8, scoped, tag = 'scoped memory for tpu_custom_call.1']
    #allocation6 [shape = 's32[2]{0}', space=sflag, size = 0x8, scoped, tag = 'scoped memory for tpu_custom_call.1']
    #allocation7 [shape = 'u8[524288]{0}', space=vmem, size = 0x80000, scoped, tag = 'input window, operand 1']
    #allocation8 [shape = 's32[2]{0}', space=sflag, size = 0x8, scoped, tag = 'scoped memory for tpu_custom_call.1']
    #allocation9 [shape = 'u8[524288]{0}', space=vmem, size = 0x80000, scoped, tag = 'input window, operand 2']
    #allocation10 [shape = 'u8[4096]{0}', space=vmem, size = 0x1000, scoped, tag = 'input window, operand 3']
    #allocation11 [shape = 's32[2]{0}', space=sflag, size = 0x8, scoped, tag = 'scoped memory for tpu_custom_call.1']
    #allocation12 [shape = 'u8[65536]{0}', space=vmem, size = 0x10000, scoped, tag = 'input window, operand 4, single buffered']
    #allocation13 [shape = 'u8[4096]{0}', space=vmem, size = 0x1000, scoped, tag = 'output window, operand 0, single buffered']
    %11 = vsyncpa [#allocation5], 0
    %12 = vsyncpa [#allocation8], 0
    %s13 = scalar_lea.sflag [#allocation8], 1
    %14 = vsyncpa %s13, 0
    %15 = vsyncpa [#allocation11], 0
    %s16 = scalar_lea.sflag [#allocation11], 1
    %17 = vsyncpa %s16, 0
    %18 = vsyncpa [#allocation6], 0
    loop: start=0, step=1, limit=4
    $region2: #{tpu_custom_call.1} parent=1 // loop_pre_header
      _
    $region3: #{tpu_custom_call.1} parent=1 // loop_header
      %s20 = sphi 0, %s24
      %p21 = scmp.ge.s32.totalorder %s20, 4
      %s27 = sphi 0, %s39
      %s28 = sphi 0, %s35
      %s29 = sphi 0, %s27
      %s30 = sphi 0, %s28
      %s31 = sphi 0, %s29
      %s32 = sphi 0, %s30
      %s42 = sphi 0, %s44
      %s45 = sphi 0, %s42
      %s46 = sphi 0, %s45
      %s62 = sphi 0, %s46
      %s68 = sphi 0, %s70
      %s71 = sphi 0, %s68
      %s72 = sphi 0, %s71
      %s88 = sphi 0, %s72
      %s94 = sphi 0, %s96
      %s97 = sphi 0, %s94
      %s98 = sphi 0, %s97
      %s114 = sphi 0, %s98
      %s120 = sphi 0, %s122
      %s123 = sphi 0, %s120
      %s124 = sphi 0, %s123
      %s140 = sphi 0, %s124
      %s144 = sphi 0, %s144
      %s146 = sphi 0, %s144
      %s147 = sphi 0, %s146
      %s161 = sphi 0, %s147
      %s165 = sphi 0, %s165
      %s167 = sphi 0, %s165
      %s168 = sphi 0, %s167
      %s182 = sphi 0, %s168
      %s188 = sphi 0, %s190
      %s191 = sphi 0, %s188
      %s192 = sphi 0, %s191
      %s208 = sphi 0, %s192
    $region4: #{tpu_custom_call.1} parent=1 // loop_header_branch
      %23 = sbr.rel (%p21) target = $region8
    $region5: #{tpu_custom_call.1} parent=1 // loop_body
      %s25 = ssub.s32 %s20, 1
      %s26 = ssub.s32 %s20, 2
      %s33 = sadd.s32 1, %s28
      %p34 = scmp.ge.s32.totalorder %s33, 2
      %s35 = scalar_select %p34, 0, %s33
      %s36 = sadd.s32 1, %s27
      %s37 = scalar_select %p34, %s36, %s27
      %p38 = scmp.ge.s32.totalorder %s37, 1
      %s39 = scalar_select %p38, 0, %s37
      %s40 = ssub.s32 %s27, %s39
      %p41 = scmp.eq.s32.totalorder %s40, 0
      %s43 = sadd.s32 %s42, 1
      %s44 = scalar_select %p41, %s42, %s43
      %p47 = pneg %p41
      %p48 = scmp.eq.s32.totalorder %s20, 1
      %p49 = por %p47, %p48
      %p50 = scmp.ne.s32.totalorder %s42, %s45
      %p51 = scmp.eq.s32.totalorder %s20, 0
      %p52 = por %p50, %p51
      %p53 = scmp.ne.s32.totalorder %s42, %s45
      %p54 = scmp.eq.s32.totalorder %s25, 1
      %p55 = por %p53, %p54
      %p56 = scmp.ne.s32.totalorder %s45, %s46
      %p57 = scmp.eq.s32.totalorder %s25, 0
      %p58 = por %p56, %p57
      %p59 = scmp.ne.s32.totalorder %s45, %s46
      %p60 = scmp.eq.s32.totalorder %s26, 1
      %p61 = por %p59, %p60
      %p63 = scmp.ne.s32.totalorder %s46, %s62
      %p64 = scmp.eq.s32.totalorder %s26, 0
      %p65 = por %p63, %p64
      %s66 = ssub.s32 %s28, %s35
      %p67 = scmp.eq.s32.totalorder %s66, 0
      %s69 = sadd.s32 %s68, 1
      %s70 = scalar_select %p67, %s68, %s69
      %p73 = pneg %p67
      %p74 = scmp.eq.s32.totalorder %s20, 1
      %p75 = por %p73, %p74
      %p76 = scmp.ne.s32.totalorder %s68, %s71
      %p77 = scmp.eq.s32.totalorder %s20, 0
      %p78 = por %p76, %p77
      %p79 = scmp.ne.s32.totalorder %s68, %s71
      %p80 = scmp.eq.s32.totalorder %s25, 1
      %p81 = por %p79, %p80
      %p82 = scmp.ne.s32.totalorder %s71, %s72
      %p83 = scmp.eq.s32.totalorder %s25, 0
      %p84 = por %p82, %p83
      %p85 = scmp.ne.s32.totalorder %s71, %s72
      %p86 = scmp.eq.s32.totalorder %s26, 1
      %p87 = por %p85, %p86
      %p89 = scmp.ne.s32.totalorder %s72, %s88
      %p90 = scmp.eq.s32.totalorder %s26, 0
      %p91 = por %p89, %p90
      %s92 = ssub.s32 %s28, %s35
      %p93 = scmp.eq.s32.totalorder %s92, 0
      %s95 = sadd.s32 %s94, 1
      %s96 = scalar_select %p93, %s94, %s95
      %p99 = pneg %p93
      %p100 = scmp.eq.s32.totalorder %s20, 1
      %p101 = por %p99, %p100
      %p102 = scmp.ne.s32.totalorder %s94, %s97
      %p103 = scmp.eq.s32.totalorder %s20, 0
      %p104 = por %p102, %p103
      %p105 = scmp.ne.s32.totalorder %s94, %s97
      %p106 = scmp.eq.s32.totalorder %s25, 1
      %p107 = por %p105, %p106
      %p108 = scmp.ne.s32.totalorder %s97, %s98
      %p109 = scmp.eq.s32.totalorder %s25, 0
      %p110 = por %p108, %p109
      %p111 = scmp.ne.s32.totalorder %s97, %s98
      %p112 = scmp.eq.s32.totalorder %s26, 1
      %p113 = por %p111, %p112
      %p115 = scmp.ne.s32.totalorder %s98, %s114
      %p116 = scmp.eq.s32.totalorder %s26, 0
      %p117 = por %p115, %p116
      %s118 = ssub.s32 %s28, %s35
      %p119 = scmp.eq.s32.totalorder %s118, 0
      %s121 = sadd.s32 %s120, 1
      %s122 = scalar_select %p119, %s120, %s121
      %p125 = pneg %p119
      %p126 = scmp.eq.s32.totalorder %s20, 1
      %p127 = por %p125, %p126
      %p128 = scmp.ne.s32.totalorder %s120, %s123
      %p129 = scmp.eq.s32.totalorder %s20, 0
      %p130 = por %p128, %p129
      %p131 = scmp.ne.s32.totalorder %s120, %s123
      %p132 = scmp.eq.s32.totalorder %s25, 1
      %p133 = por %p131, %p132
      %p134 = scmp.ne.s32.totalorder %s123, %s124
      %p135 = scmp.eq.s32.totalorder %s25, 0
      %p136 = por %p134, %p135
      %p137 = scmp.ne.s32.totalorder %s123, %s124
      %p138 = scmp.eq.s32.totalorder %s26, 1
      %p139 = por %p137, %p138
      %p141 = scmp.ne.s32.totalorder %s124, %s140
      %p142 = scmp.eq.s32.totalorder %s26, 0
      %p143 = por %p141, %p142
      %s145 = sadd.s32 %s144, 1
      %p148 = scmp.eq.s32.totalorder %s20, 1
      %p149 = scmp.ne.s32.totalorder %s144, %s146
      %p150 = scmp.eq.s32.totalorder %s20, 0
      %p151 = por %p149, %p150
      %p152 = scmp.ne.s32.totalorder %s144, %s146
      %p153 = scmp.eq.s32.totalorder %s25, 1
      %p154 = por %p152, %p153
      %p155 = scmp.ne.s32.totalorder %s146, %s147
      %p156 = scmp.eq.s32.totalorder %s25, 0
      %p157 = por %p155, %p156
      %p158 = scmp.ne.s32.totalorder %s146, %s147
      %p159 = scmp.eq.s32.totalorder %s26, 1
      %p160 = por %p158, %p159
      %p162 = scmp.ne.s32.totalorder %s147, %s161
      %p163 = scmp.eq.s32.totalorder %s26, 0
      %p164 = por %p162, %p163
      %s166 = sadd.s32 %s165, 1
      %p169 = scmp.eq.s32.totalorder %s20, 1
      %p170 = scmp.ne.s32.totalorder %s165, %s167
      %p171 = scmp.eq.s32.totalorder %s20, 0
      %p172 = por %p170, %p171
      %p173 = scmp.ne.s32.totalorder %s165, %s167
      %p174 = scmp.eq.s32.totalorder %s25, 1
      %p175 = por %p173, %p174
      %p176 = scmp.ne.s32.totalorder %s167, %s168
      %p177 = scmp.eq.s32.totalorder %s25, 0
      %p178 = por %p176, %p177
      %p179 = scmp.ne.s32.totalorder %s167, %s168
      %p180 = scmp.eq.s32.totalorder %s26, 1
      %p181 = por %p179, %p180
      %p183 = scmp.ne.s32.totalorder %s168, %s182
      %p184 = scmp.eq.s32.totalorder %s26, 0
      %p185 = por %p183, %p184
      %s186 = ssub.s32 %s27, %s39
      %p187 = scmp.eq.s32.totalorder %s186, 0
      %s189 = sadd.s32 %s188, 1
      %s190 = scalar_select %p187, %s188, %s189
      %p193 = pneg %p187
      %p194 = scmp.eq.s32.totalorder %s20, 1
      %p195 = por %p193, %p194
      %p196 = scmp.ne.s32.totalorder %s188, %s191
      %p197 = scmp.eq.s32.totalorder %s20, 0
      %p198 = por %p196, %p197
      %p199 = scmp.ne.s32.totalorder %s188, %s191
      %p200 = scmp.eq.s32.totalorder %s25, 1
      %p201 = por %p199, %p200
      %p202 = scmp.ne.s32.totalorder %s191, %s192
      %p203 = scmp.eq.s32.totalorder %s25, 0
      %p204 = por %p202, %p203
      %p205 = scmp.ne.s32.totalorder %s191, %s192
      %p206 = scmp.eq.s32.totalorder %s26, 1
      %p207 = por %p205, %p206
      %p209 = scmp.ne.s32.totalorder %s192, %s208
      %p210 = scmp.eq.s32.totalorder %s26, 0
      %p211 = por %p209, %p210
      %p212 = scmp.le.s32.totalorder 1, %s20
      %p213 = scmp.lt.s32.totalorder %s20, 3
      %p214 = pnand %p212, %p213
      %p215 = pneg %p214
      // Predicated region
      $region9: #{tpu_custom_call.1} parent=5 // pred_check
        _
      $region10: #{tpu_custom_call.1} parent=5 // pred_check_branch
        %217 = sbr.rel (%p214) target = $region12
      $region11: #{tpu_custom_call.1} parent=5 // pred_region
        %s218 = ssub.s32 %s20, 1
        // Predicated region
        $region13: #{tpu_custom_call.1} parent=11 // pred_check
          %p219 = pneg %p58
        $region14: #{tpu_custom_call.1} parent=11 // pred_check_branch
          %221 = sbr.rel (%p219) target = $region16
        $region15: #{tpu_custom_call.1} parent=11 // pred_region
          %223 = vsyncadd [#allocation5], 0
          %s224 = smul.addr %s29, 8
          %s225 = scalar_lea.hbm %s0, %s224
          %s226 = sshll.u32 %s225, 4
          %s227 = int_to_ptr.hbm [resolvable:$true] %s226
          %s228 = sshll.u32 [#allocation4], 4
          %s229 = int_to_ptr.vmem [resolvable:$true] %s228
          %234 = dma.hbm_to_vmem [thread:$0]  %s227, 1024, %s229, [#allocation5], 128, 128, 8
        $region16: #{tpu_custom_call.1} parent=11 // pred_fallthru
          _
        // Predicated region
        $region17: #{tpu_custom_call.1} parent=11 // pred_check
          %p235 = pneg %p157
        $region18: #{tpu_custom_call.1} parent=11 // pred_check_branch
          %237 = sbr.rel (%p235) target = $region20
        $region19: #{tpu_custom_call.1} parent=11 // pred_region
          %239 = vsyncadd [#allocation11], 0
          %s240 = sshll.u32 %s4, 4
          %s241 = int_to_ptr.hbm [resolvable:$true] %s240
          %s242 = sshll.u32 [#allocation12], 4
          %s243 = int_to_ptr.vmem [resolvable:$true] %s242
          %248 = dma.hbm_to_vmem [thread:$0]  %s241, 2048, %s243, [#allocation11], 128, 128, 8
        $region20: #{tpu_custom_call.1} parent=11 // pred_fallthru
          _
        // Predicated region
        $region21: #{tpu_custom_call.1} parent=11 // pred_check
          %p249 = pneg %p178
        $region22: #{tpu_custom_call.1} parent=11 // pred_check_branch
          %251 = sbr.rel (%p249) target = $region24
        $region23: #{tpu_custom_call.1} parent=11 // pred_region
          _
        $region24: #{tpu_custom_call.1} parent=11 // pred_fallthru
          _
      $region12: #{tpu_custom_call.1} parent=5 // pred_fallthru
        _
      %p252 = scmp.lt.s32.totalorder %s20, 2
      // Predicated region
      $region25: #{tpu_custom_call.1} parent=5 // pred_check
        %p253 = pneg %p252
      $region26: #{tpu_custom_call.1} parent=5 // pred_check_branch
        %255 = sbr.rel (%p253) target = $region28
      $region27: #{tpu_custom_call.1} parent=5 // pred_region
        // Predicated region
        $region29: #{tpu_custom_call.1} parent=27 // pred_check
          %p256 = pneg %p78
        $region30: #{tpu_custom_call.1} parent=27 // pred_check_branch
          %258 = sbr.rel (%p256) target = $region32
        $region31: #{tpu_custom_call.1} parent=27 // pred_region
          %s259 = sand.u32 %s20, 1
          %s260 = scalar_lea.sflag [#allocation8], %s259
          %s261 = sand.u32 %s68, 1
          %s262 = smul.addr %s261, 512
          %s263 = scalar_lea.vmem [#allocation7], %s262
          %265 = vsyncadd %s260, 0
          %s266 = smul.addr %s28, 64
          %s267 = smul.addr %s266, 8
          %s268 = scalar_lea.hbm %s1, %s267
          %s269 = sshll.u32 %s268, 4
          %s270 = int_to_ptr.hbm [resolvable:$true] %s269
          %s271 = sshll.u32 %s263, 4
          %s272 = int_to_ptr.vmem [resolvable:$true] %s271
          %277 = dma.hbm_to_vmem [thread:$0]  %s270, 8192, %s272, %s260, 512, 512, 32
        $region32: #{tpu_custom_call.1} parent=27 // pred_fallthru
          _
        // Predicated region
        $region33: #{tpu_custom_call.1} parent=27 // pred_check
          %p278 = pneg %p104
        $region34: #{tpu_custom_call.1} parent=27 // pred_check_branch
          %280 = sbr.rel (%p278) target = $region36
        $region35: #{tpu_custom_call.1} parent=27 // pred_region
          %s281 = sand.u32 %s20, 1
          %s282 = scalar_lea.sflag [#allocation8], %s281
          %s283 = sand.u32 %s94, 1
          %s284 = smul.addr %s283, 512
          %s285 = scalar_lea.vmem [#allocation9], %s284
          %287 = vsyncadd %s282, 0
          %s288 = smul.addr %s28, 64
          %s289 = smul.addr %s288, 8
          %s290 = scalar_lea.hbm %s2, %s289
          %s291 = sshll.u32 %s290, 4
          %s292 = int_to_ptr.hbm [resolvable:$true] %s291
          %s293 = sshll.u32 %s285, 4
          %s294 = int_to_ptr.vmem [resolvable:$true] %s293
          %299 = dma.hbm_to_vmem [thread:$0]  %s292, 8192, %s294, %s282, 512, 512, 32
        $region36: #{tpu_custom_call.1} parent=27 // pred_fallthru
          _
        // Predicated region
        $region37: #{tpu_custom_call.1} parent=27 // pred_check
          %p300 = pneg %p130
        $region38: #{tpu_custom_call.1} parent=27 // pred_check_branch
          %302 = sbr.rel (%p300) target = $region40
        $region39: #{tpu_custom_call.1} parent=27 // pred_region
          %s303 = sand.u32 %s20, 1
          %s304 = scalar_lea.sflag [#allocation11], %s303
          %s305 = sand.u32 %s120, 1
          %s306 = smul.addr %s305, 4
          %s307 = scalar_lea.vmem [#allocation10], %s306
          %309 = vsyncadd %s304, 0
          %s310 = smul.addr %s28, 4
          %s311 = scalar_lea.hbm %s3, %s310
          %s313 = sshll.u32 %s311, 4
          %s314 = int_to_ptr.hbm [resolvable:$true] %s313
          %s315 = sshll.u32 %s307, 4
          %s316 = int_to_ptr.vmem [resolvable:$true] %s315
          %318 = dma.hbm_to_vmem [thread:$0]  %s314, 64, %s316, %s304
        $region40: #{tpu_custom_call.1} parent=27 // pred_fallthru
          _
      $region28: #{tpu_custom_call.1} parent=5 // pred_fallthru
        _
      %p319 = scmp.le.s32.totalorder 1, %s20
      %p320 = scmp.lt.s32.totalorder %s20, 3
      %p321 = pnand %p319, %p320
      %p322 = pneg %p321
      // Predicated region
      $region41: #{tpu_custom_call.1} parent=5 // pred_check
        _
      $region42: #{tpu_custom_call.1} parent=5 // pred_check_branch
        %324 = sbr.rel (%p321) target = $region44
      $region43: #{tpu_custom_call.1} parent=5 // pred_region
        %s325 = ssub.s32 %s20, 1
        // Predicated region
        $region45: #{tpu_custom_call.1} parent=43 // pred_check
          %p326 = pneg %p58
        $region46: #{tpu_custom_call.1} parent=43 // pred_check_branch
          %328 = sbr.rel (%p326) target = $region48
        $region47: #{tpu_custom_call.1} parent=43 // pred_region
          %330 = dma.done [#allocation5], 1024
        $region48: #{tpu_custom_call.1} parent=43 // pred_fallthru
          _
        %s331 = sand.u32 %s25, 1
        %s332 = scalar_lea.sflag [#allocation8], %s331
        %s333 = sand.u32 %s71, 1
        %s334 = smul.addr %s333, 512
        %s335 = scalar_lea.vmem [#allocation7], %s334
        // Predicated region
        $region49: #{tpu_custom_call.1} parent=43 // pred_check
          %p336 = pneg %p84
        $region50: #{tpu_custom_call.1} parent=43 // pred_check_branch
          %338 = sbr.rel (%p336) target = $region52
        $region51: #{tpu_custom_call.1} parent=43 // pred_region
          %340 = dma.done %s332, 8192
        $region52: #{tpu_custom_call.1} parent=43 // pred_fallthru
          _
        %s341 = sand.u32 %s25, 1
        %s342 = scalar_lea.sflag [#allocation8], %s341
        %s343 = sand.u32 %s97, 1
        %s344 = smul.addr %s343, 512
        %s345 = scalar_lea.vmem [#allocation9], %s344
        // Predicated region
        $region53: #{tpu_custom_call.1} parent=43 // pred_check
          %p346 = pneg %p110
        $region54: #{tpu_custom_call.1} parent=43 // pred_check_branch
          %348 = sbr.rel (%p346) target = $region56
        $region55: #{tpu_custom_call.1} parent=43 // pred_region
          %350 = dma.done %s342, 8192
        $region56: #{tpu_custom_call.1} parent=43 // pred_fallthru
          _
        %s351 = sand.u32 %s25, 1
        %s352 = scalar_lea.sflag [#allocation11], %s351
        %s353 = sand.u32 %s123, 1
        %s354 = smul.addr %s353, 4
        %s355 = scalar_lea.vmem [#allocation10], %s354
        // Predicated region
        $region57: #{tpu_custom_call.1} parent=43 // pred_check
          %p356 = pneg %p136
        $region58: #{tpu_custom_call.1} parent=43 // pred_check_branch
          %358 = sbr.rel (%p356) target = $region60
        $region59: #{tpu_custom_call.1} parent=43 // pred_region
          %360 = dma.done %s352, 64
        $region60: #{tpu_custom_call.1} parent=43 // pred_fallthru
          _
        // Predicated region
        $region61: #{tpu_custom_call.1} parent=43 // pred_check
          %p361 = pneg %p157
        $region62: #{tpu_custom_call.1} parent=43 // pred_check_branch
          %363 = sbr.rel (%p361) target = $region64
        $region63: #{tpu_custom_call.1} parent=43 // pred_region
          %365 = dma.done [#allocation11], 2048
        $region64: #{tpu_custom_call.1} parent=43 // pred_fallthru
          _
        %p366 = pneg %p58
        %p367 = pneg %p55
        %s368 = sand.u32 %s25, 1
        %s369 = scalar_lea.sflag [#allocation8], %s368
        %s370 = sand.u32 %s71, 1
        %s371 = smul.addr %s370, 512
        %s372 = scalar_lea.vmem [#allocation7], %s371
        %p373 = pneg %p84
        %p374 = pneg %p81
        %s375 = sand.u32 %s25, 1
        %s376 = scalar_lea.sflag [#allocation8], %s375
        %s377 = sand.u32 %s97, 1
        %s378 = smul.addr %s377, 512
        %s379 = scalar_lea.vmem [#allocation9], %s378
        %p380 = pneg %p110
        %p381 = pneg %p107
        %s382 = sand.u32 %s25, 1
        %s383 = scalar_lea.sflag [#allocation11], %s382
        %s384 = sand.u32 %s123, 1
        %s385 = smul.addr %s384, 4
        %s386 = scalar_lea.vmem [#allocation10], %s385
        %p387 = pneg %p136
        %p388 = pneg %p133
        %p389 = pneg %p157
        %p390 = pneg %p154
        %p391 = pneg %p178
        %p392 = pneg %p175
        %p393 = pneg %p204
        %p394 = pneg %p201
        %p395 = scmp.eq.s32.totalorder %s30, 0
        // Predicated region
        $region65: #{tpu_custom_call.1} parent=43 // pred_check
          %p396 = pneg %p395
        $region66: #{tpu_custom_call.1} parent=43 // pred_check_branch
          %398 = sbr.rel (%p396) target = $region68
        $region67: #{tpu_custom_call.1} parent=43 // pred_region
          %v399 = vld [vmem:[#allocation4] sm:$0xff]
          %v400 = vld [vmem:[#allocation4 + $0x8] sm:$0xff]
          %v401 = vld [vmem:[#allocation4 + $0x10] sm:$0xff]
          %v402 = vld [vmem:[#allocation4 + $0x18] sm:$0xff]
          %v403 = vld [vmem:[#allocation4 + $0x20] sm:$0xff]
          %v404 = vld [vmem:[#allocation4 + $0x28] sm:$0xff]
          %v405 = vld [vmem:[#allocation4 + $0x30] sm:$0xff]
          %v406 = vld [vmem:[#allocation4 + $0x38] sm:$0xff]
          %407 = vst [vmem:[#allocation2] sm:$0xff] %v399
          %408 = vst [vmem:[#allocation2 + $0x8] sm:$0xff] %v400
          %409 = vst [vmem:[#allocation2 + $0x10] sm:$0xff] %v401
          %410 = vst [vmem:[#allocation2 + $0x18] sm:$0xff] %v402
          %411 = vst [vmem:[#allocation2 + $0x20] sm:$0xff] %v403
          %412 = vst [vmem:[#allocation2 + $0x28] sm:$0xff] %v404
          %413 = vst [vmem:[#allocation2 + $0x30] sm:$0xff] %v405
          %414 = vst [vmem:[#allocation2 + $0x38] sm:$0xff] %v406
        $region68: #{tpu_custom_call.1} parent=43 // pred_fallthru
          _
        %v415 = vld [vmem:[#allocation2] sm:$0xff]
        %v416 = vld [vmem:[#allocation2 + $0x8] sm:$0xff]
        %v417 = vld [vmem:[#allocation2 + $0x10] sm:$0xff]
        %v418 = vld [vmem:[#allocation2 + $0x18] sm:$0xff]
        %v419 = vld [vmem:[#allocation2 + $0x20] sm:$0xff]
        %v420 = vld [vmem:[#allocation2 + $0x28] sm:$0xff]
        %v421 = vld [vmem:[#allocation2 + $0x30] sm:$0xff]
        %v422 = vld [vmem:[#allocation2 + $0x38] sm:$0xff]
        %v423 = vld [vmem:[%s335] sm:$0xff]
        %v424 = vld [vmem:[%s335 + $0x8] sm:$0xff]
        %v425 = vld [vmem:[%s335 + $0x10] sm:$0xff]
        %v426 = vld [vmem:[%s335 + $0x18] sm:$0xff]
        %v427 = vld [vmem:[%s335 + $0x20] sm:$0xff]
        %v428 = vld [vmem:[%s335 + $0x28] sm:$0xff]
        %v429 = vld [vmem:[%s335 + $0x30] sm:$0xff]
        %v430 = vld [vmem:[%s335 + $0x38] sm:$0xff]
        %v431 = vld [vmem:[%s335 + $0x40] sm:$0xff]
        %v432 = vld [vmem:[%s335 + $0x48] sm:$0xff]
        %v433 = vld [vmem:[%s335 + $0x50] sm:$0xff]
        %v434 = vld [vmem:[%s335 + $0x58] sm:$0xff]
        %v435 = vld [vmem:[%s335 + $0x60] sm:$0xff]
        %v436 = vld [vmem:[%s335 + $0x68] sm:$0xff]
        %v437 = vld [vmem:[%s335 + $0x70] sm:$0xff]
        %v438 = vld [vmem:[%s335 + $0x78] sm:$0xff]
        %v439 = vld [vmem:[%s335 + $0x80] sm:$0xff]
        %v440 = vld [vmem:[%s335 + $0x88] sm:$0xff]
        %v441 = vld [vmem:[%s335 + $0x90] sm:$0xff]
        %v442 = vld [vmem:[%s335 + $0x98] sm:$0xff]
        %v443 = vld [vmem:[%s335 + $0xa0] sm:$0xff]
        %v444 = vld [vmem:[%s335 + $0xa8] sm:$0xff]
        %v445 = vld [vmem:[%s335 + $0xb0] sm:$0xff]
        %v446 = vld [vmem:[%s335 + $0xb8] sm:$0xff]
        %v447 = vld [vmem:[%s335 + $0xc0] sm:$0xff]
        %v448 = vld [vmem:[%s335 + $0xc8] sm:$0xff]
        %v449 = vld [vmem:[%s335 + $0xd0] sm:$0xff]
        %v450 = vld [vmem:[%s335 + $0xd8] sm:$0xff]
        %v451 = vld [vmem:[%s335 + $0xe0] sm:$0xff]
        %v452 = vld [vmem:[%s335 + $0xe8] sm:$0xff]
        %v453 = vld [vmem:[%s335 + $0xf0] sm:$0xff]
        %v454 = vld [vmem:[%s335 + $0xf8] sm:$0xff]
        %v455 = vld [vmem:[%s335 + $0x100] sm:$0xff]
        %v456 = vld [vmem:[%s335 + $0x108] sm:$0xff]
        %v457 = vld [vmem:[%s335 + $0x110] sm:$0xff]
        %v458 = vld [vmem:[%s335 + $0x118] sm:$0xff]
        %v459 = vld [vmem:[%s335 + $0x120] sm:$0xff]
        %v460 = vld [vmem:[%s335 + $0x128] sm:$0xff]
        %v461 = vld [vmem:[%s335 + $0x130] sm:$0xff]
        %v462 = vld [vmem:[%s335 + $0x138] sm:$0xff]
        %v463 = vld [vmem:[%s335 + $0x140] sm:$0xff]
        %v464 = vld [vmem:[%s335 + $0x148] sm:$0xff]
        %v465 = vld [vmem:[%s335 + $0x150] sm:$0xff]
        %v466 = vld [vmem:[%s335 + $0x158] sm:$0xff]
        %v467 = vld [vmem:[%s335 + $0x160] sm:$0xff]
        %v468 = vld [vmem:[%s335 + $0x168] sm:$0xff]
        %v469 = vld [vmem:[%s335 + $0x170] sm:$0xff]
        %v470 = vld [vmem:[%s335 + $0x178] sm:$0xff]
        %v471 = vld [vmem:[%s335 + $0x180] sm:$0xff]
        %v472 = vld [vmem:[%s335 + $0x188] sm:$0xff]
        %v473 = vld [vmem:[%s335 + $0x190] sm:$0xff]
        %v474 = vld [vmem:[%s335 + $0x198] sm:$0xff]
        %v475 = vld [vmem:[%s335 + $0x1a0] sm:$0xff]
        %v476 = vld [vmem:[%s335 + $0x1a8] sm:$0xff]
        %v477 = vld [vmem:[%s335 + $0x1b0] sm:$0xff]
        %v478 = vld [vmem:[%s335 + $0x1b8] sm:$0xff]
        %v479 = vld [vmem:[%s335 + $0x1c0] sm:$0xff]
        %v480 = vld [vmem:[%s335 + $0x1c8] sm:$0xff]
        %v481 = vld [vmem:[%s335 + $0x1d0] sm:$0xff]
        %v482 = vld [vmem:[%s335 + $0x1d8] sm:$0xff]
        %v483 = vld [vmem:[%s335 + $0x1e0] sm:$0xff]
        %v484 = vld [vmem:[%s335 + $0x1e8] sm:$0xff]
        %v485 = vld [vmem:[%s335 + $0x1f0] sm:$0xff]
        %v486 = vld [vmem:[%s335 + $0x1f8] sm:$0xff]
        %v487 = vld [vmem:[%s355] sm:$0xf]
        %v489 = vperm.slane %v487, 0
        %v490 = vperm.slane %v487, 1
        %v491 = vperm.slane %v487, 2
        %v492 = vperm.slane %v487, 3
        %497 = vmatpush.msra.mxu0 %v483
        %498 = vmatpush.msra.mxu0 %v479
        %499 = vmatpush.msra.mxu0 %v475
        %500 = vmatpush.msra.mxu0 %v471
        %501 = vmatpush.msra.mxu0 %v467
        %502 = vmatpush.msra.mxu0 %v463
        %503 = vmatpush.msra.mxu0 %v459
        %504 = vmatpush.msra.mxu0 %v455
        %505 = vmatpush.msra.mxu0 %v451
        %506 = vmatpush.msra.mxu0 %v447
        %507 = vmatpush.msra.mxu0 %v443
        %508 = vmatpush.msra.mxu0 %v439
        %509 = vmatpush.msra.mxu0 %v435
        %510 = vmatpush.msra.mxu0 %v431
        %511 = vmatpush.msra.mxu0 %v427
        %512 = vmatpush.msra.mxu0 %v423
        %513 = vmatmul.f32.gmra.mxu0 %v415
        %v514 = vpop.f32.mrf.mxu0
        %v515 = vadd.f32 %v489, %v514
        %516 = vmatmul.f32.gmra.mxu0 %v416
        %v517 = vpop.f32.mrf.mxu0
        %v518 = vadd.f32 %v489, %v517
        %519 = vmatmul.f32.gmra.mxu0 %v417
        %v520 = vpop.f32.mrf.mxu0
        %v521 = vadd.f32 %v489, %v520
        %522 = vmatmul.f32.gmra.mxu0 %v418
        %v523 = vpop.f32.mrf.mxu0
        %v524 = vadd.f32 %v489, %v523
        %525 = vmatmul.f32.gmra.mxu0 %v419
        %v526 = vpop.f32.mrf.mxu0
        %v527 = vadd.f32 %v489, %v526
        %528 = vmatmul.f32.gmra.mxu0 %v420
        %v529 = vpop.f32.mrf.mxu0
        %v530 = vadd.f32 %v489, %v529
        %531 = vmatmul.f32.gmra.mxu0 %v421
        %v532 = vpop.f32.mrf.mxu0
        %v533 = vadd.f32 %v489, %v532
        %534 = vmatmul.f32.gmra.mxu0 %v422
        %v535 = vpop.f32.mrf.mxu0
        %v536 = vadd.f32 %v489, %v535
        %537 = vdwg.mxu0
        %538 = vmatpush.msra.mxu0 %v484
        %539 = vmatpush.msra.mxu0 %v480
        %540 = vmatpush.msra.mxu0 %v476
        %541 = vmatpush.msra.mxu0 %v472
        %542 = vmatpush.msra.mxu0 %v468
        %543 = vmatpush.msra.mxu0 %v464
        %544 = vmatpush.msra.mxu0 %v460
        %545 = vmatpush.msra.mxu0 %v456
        %546 = vmatpush.msra.mxu0 %v452
        %547 = vmatpush.msra.mxu0 %v448
        %548 = vmatpush.msra.mxu0 %v444
        %549 = vmatpush.msra.mxu0 %v440
        %550 = vmatpush.msra.mxu0 %v436
        %551 = vmatpush.msra.mxu0 %v432
        %552 = vmatpush.msra.mxu0 %v428
        %553 = vmatpush.msra.mxu0 %v424
        %554 = vmatmul.f32.gmra.mxu0 %v415
        %v555 = vpop.f32.mrf.mxu0
        %v556 = vadd.f32 %v490, %v555
        %557 = vmatmul.f32.gmra.mxu0 %v416
        %v558 = vpop.f32.mrf.mxu0
        %v559 = vadd.f32 %v490, %v558
        %560 = vmatmul.f32.gmra.mxu0 %v417
        %v561 = vpop.f32.mrf.mxu0
        %v562 = vadd.f32 %v490, %v561
        %563 = vmatmul.f32.gmra.mxu0 %v418
        %v564 = vpop.f32.mrf.mxu0
        %v565 = vadd.f32 %v490, %v564
        %566 = vmatmul.f32.gmra.mxu0 %v419
        %v567 = vpop.f32.mrf.mxu0
        %v568 = vadd.f32 %v490, %v567
        %569 = vmatmul.f32.gmra.mxu0 %v420
        %v570 = vpop.f32.mrf.mxu0
        %v571 = vadd.f32 %v490, %v570
        %572 = vmatmul.f32.gmra.mxu0 %v421
        %v573 = vpop.f32.mrf.mxu0
        %v574 = vadd.f32 %v490, %v573
        %575 = vmatmul.f32.gmra.mxu0 %v422
        %v576 = vpop.f32.mrf.mxu0
        %v577 = vadd.f32 %v490, %v576
        %578 = vdwg.mxu0
        %579 = vmatpush.msra.mxu0 %v485
        %580 = vmatpush.msra.mxu0 %v481
        %581 = vmatpush.msra.mxu0 %v477
        %582 = vmatpush.msra.mxu0 %v473
        %583 = vmatpush.msra.mxu0 %v469
        %584 = vmatpush.msra.mxu0 %v465
        %585 = vmatpush.msra.mxu0 %v461
        %586 = vmatpush.msra.mxu0 %v457
        %587 = vmatpush.msra.mxu0 %v453
        %588 = vmatpush.msra.mxu0 %v449
        %589 = vmatpush.msra.mxu0 %v445
        %590 = vmatpush.msra.mxu0 %v441
        %591 = vmatpush.msra.mxu0 %v437
        %592 = vmatpush.msra.mxu0 %v433
        %593 = vmatpush.msra.mxu0 %v429
        %594 = vmatpush.msra.mxu0 %v425
        %595 = vmatmul.f32.gmra.mxu0 %v415
        %v596 = vpop.f32.mrf.mxu0
        %v597 = vadd.f32 %v491, %v596
        %598 = vmatmul.f32.gmra.mxu0 %v416
        %v599 = vpop.f32.mrf.mxu0
        %v600 = vadd.f32 %v491, %v599
        %601 = vmatmul.f32.gmra.mxu0 %v417
        %v602 = vpop.f32.mrf.mxu0
        %v603 = vadd.f32 %v491, %v602
        %604 = vmatmul.f32.gmra.mxu0 %v418
        %v605 = vpop.f32.mrf.mxu0
        %v606 = vadd.f32 %v491, %v605
        %607 = vmatmul.f32.gmra.mxu0 %v419
        %v608 = vpop.f32.mrf.mxu0
        %v609 = vadd.f32 %v491, %v608
        %610 = vmatmul.f32.gmra.mxu0 %v420
        %v611 = vpop.f32.mrf.mxu0
        %v612 = vadd.f32 %v491, %v611
        %613 = vmatmul.f32.gmra.mxu0 %v421
        %v614 = vpop.f32.mrf.mxu0
        %v615 = vadd.f32 %v491, %v614
        %616 = vmatmul.f32.gmra.mxu0 %v422
        %v617 = vpop.f32.mrf.mxu0
        %v618 = vadd.f32 %v491, %v617
        %619 = vdwg.mxu0
        %620 = vmatpush.msra.mxu0 %v486
        %621 = vmatpush.msra.mxu0 %v482
        %622 = vmatpush.msra.mxu0 %v478
        %623 = vmatpush.msra.mxu0 %v474
        %624 = vmatpush.msra.mxu0 %v470
        %625 = vmatpush.msra.mxu0 %v466
        %626 = vmatpush.msra.mxu0 %v462
        %627 = vmatpush.msra.mxu0 %v458
        %628 = vmatpush.msra.mxu0 %v454
        %629 = vmatpush.msra.mxu0 %v450
        %630 = vmatpush.msra.mxu0 %v446
        %631 = vmatpush.msra.mxu0 %v442
        %632 = vmatpush.msra.mxu0 %v438
        %633 = vmatpush.msra.mxu0 %v434
        %634 = vmatpush.msra.mxu0 %v430
        %635 = vmatpush.msra.mxu0 %v426
        %636 = vmatmul.f32.gmra.mxu0 %v415
        %v637 = vpop.f32.mrf.mxu0
        %v638 = vadd.f32 %v492, %v637
        %639 = vmatmul.f32.gmra.mxu0 %v416
        %v640 = vpop.f32.mrf.mxu0
        %v641 = vadd.f32 %v492, %v640
        %642 = vmatmul.f32.gmra.mxu0 %v417
        %v643 = vpop.f32.mrf.mxu0
        %v644 = vadd.f32 %v492, %v643
        %645 = vmatmul.f32.gmra.mxu0 %v418
        %v646 = vpop.f32.mrf.mxu0
        %v647 = vadd.f32 %v492, %v646
        %648 = vmatmul.f32.gmra.mxu0 %v419
        %v649 = vpop.f32.mrf.mxu0
        %v650 = vadd.f32 %v492, %v649
        %651 = vmatmul.f32.gmra.mxu0 %v420
        %v652 = vpop.f32.mrf.mxu0
        %v653 = vadd.f32 %v492, %v652
        %654 = vmatmul.f32.gmra.mxu0 %v421
        %v655 = vpop.f32.mrf.mxu0
        %v656 = vadd.f32 %v492, %v655
        %657 = vmatmul.f32.gmra.mxu0 %v422
        %v658 = vpop.f32.mrf.mxu0
        %v659 = vadd.f32 %v492, %v658
        %660 = vdwg.mxu0
        %661 = vst [vmem:[#allocation3] sm:$0xff] %v515
        %662 = vst [vmem:[#allocation3 + $0x8] sm:$0xff] %v556
        %663 = vst [vmem:[#allocation3 + $0x10] sm:$0xff] %v597
        %664 = vst [vmem:[#allocation3 + $0x18] sm:$0xff] %v638
        %665 = vst [vmem:[#allocation3 + $0x20] sm:$0xff] %v518
        %666 = vst [vmem:[#allocation3 + $0x28] sm:$0xff] %v559
        %667 = vst [vmem:[#allocation3 + $0x30] sm:$0xff] %v600
        %668 = vst [vmem:[#allocation3 + $0x38] sm:$0xff] %v641
        %669 = vst [vmem:[#allocation3 + $0x40] sm:$0xff] %v521
        %670 = vst [vmem:[#allocation3 + $0x48] sm:$0xff] %v562
        %671 = vst [vmem:[#allocation3 + $0x50] sm:$0xff] %v603
        %672 = vst [vmem:[#allocation3 + $0x58] sm:$0xff] %v644
        %673 = vst [vmem:[#allocation3 + $0x60] sm:$0xff] %v524
        %674 = vst [vmem:[#allocation3 + $0x68] sm:$0xff] %v565
        %675 = vst [vmem:[#allocation3 + $0x70] sm:$0xff] %v606
        %676 = vst [vmem:[#allocation3 + $0x78] sm:$0xff] %v647
        %677 = vst [vmem:[#allocation3 + $0x80] sm:$0xff] %v527
        %678 = vst [vmem:[#allocation3 + $0x88] sm:$0xff] %v568
        %679 = vst [vmem:[#allocation3 + $0x90] sm:$0xff] %v609
        %680 = vst [vmem:[#allocation3 + $0x98] sm:$0xff] %v650
        %681 = vst [vmem:[#allocation3 + $0xa0] sm:$0xff] %v530
        %682 = vst [vmem:[#allocation3 + $0xa8] sm:$0xff] %v571
        %683 = vst [vmem:[#allocation3 + $0xb0] sm:$0xff] %v612
        %684 = vst [vmem:[#allocation3 + $0xb8] sm:$0xff] %v653
        %685 = vst [vmem:[#allocation3 + $0xc0] sm:$0xff] %v533
        %686 = vst [vmem:[#allocation3 + $0xc8] sm:$0xff] %v574
        %687 = vst [vmem:[#allocation3 + $0xd0] sm:$0xff] %v615
        %688 = vst [vmem:[#allocation3 + $0xd8] sm:$0xff] %v656
        %689 = vst [vmem:[#allocation3 + $0xe0] sm:$0xff] %v536
        %690 = vst [vmem:[#allocation3 + $0xe8] sm:$0xff] %v577
        %691 = vst [vmem:[#allocation3 + $0xf0] sm:$0xff] %v618
        %692 = vst [vmem:[#allocation3 + $0xf8] sm:$0xff] %v659
        %v693 = vld [vmem:[%s345] sm:$0xff]
        %v694 = vld [vmem:[%s345 + $0x8] sm:$0xff]
        %v695 = vld [vmem:[%s345 + $0x10] sm:$0xff]
        %v696 = vld [vmem:[%s345 + $0x18] sm:$0xff]
        %v697 = vld [vmem:[%s345 + $0x20] sm:$0xff]
        %v698 = vld [vmem:[%s345 + $0x28] sm:$0xff]
        %v699 = vld [vmem:[%s345 + $0x30] sm:$0xff]
        %v700 = vld [vmem:[%s345 + $0x38] sm:$0xff]
        %v701 = vld [vmem:[%s345 + $0x40] sm:$0xff]
        %v702 = vld [vmem:[%s345 + $0x48] sm:$0xff]
        %v703 = vld [vmem:[%s345 + $0x50] sm:$0xff]
        %v704 = vld [vmem:[%s345 + $0x58] sm:$0xff]
        %v705 = vld [vmem:[%s345 + $0x60] sm:$0xff]
        %v706 = vld [vmem:[%s345 + $0x68] sm:$0xff]
        %v707 = vld [vmem:[%s345 + $0x70] sm:$0xff]
        %v708 = vld [vmem:[%s345 + $0x78] sm:$0xff]
        %v709 = vld [vmem:[%s345 + $0x80] sm:$0xff]
        %v710 = vld [vmem:[%s345 + $0x88] sm:$0xff]
        %v711 = vld [vmem:[%s345 + $0x90] sm:$0xff]
        %v712 = vld [vmem:[%s345 + $0x98] sm:$0xff]
        %v713 = vld [vmem:[%s345 + $0xa0] sm:$0xff]
        %v714 = vld [vmem:[%s345 + $0xa8] sm:$0xff]
        %v715 = vld [vmem:[%s345 + $0xb0] sm:$0xff]
        %v716 = vld [vmem:[%s345 + $0xb8] sm:$0xff]
        %v717 = vld [vmem:[%s345 + $0xc0] sm:$0xff]
        %v718 = vld [vmem:[%s345 + $0xc8] sm:$0xff]
        %v719 = vld [vmem:[%s345 + $0xd0] sm:$0xff]
        %v720 = vld [vmem:[%s345 + $0xd8] sm:$0xff]
        %v721 = vld [vmem:[%s345 + $0xe0] sm:$0xff]
        %v722 = vld [vmem:[%s345 + $0xe8] sm:$0xff]
        %v723 = vld [vmem:[%s345 + $0xf0] sm:$0xff]
        %v724 = vld [vmem:[%s345 + $0xf8] sm:$0xff]
        %v725 = vld [vmem:[%s345 + $0x100] sm:$0xff]
        %v726 = vld [vmem:[%s345 + $0x108] sm:$0xff]
        %v727 = vld [vmem:[%s345 + $0x110] sm:$0xff]
        %v728 = vld [vmem:[%s345 + $0x118] sm:$0xff]
        %v729 = vld [vmem:[%s345 + $0x120] sm:$0xff]
        %v730 = vld [vmem:[%s345 + $0x128] sm:$0xff]
        %v731 = vld [vmem:[%s345 + $0x130] sm:$0xff]
        %v732 = vld [vmem:[%s345 + $0x138] sm:$0xff]
        %v733 = vld [vmem:[%s345 + $0x140] sm:$0xff]
        %v734 = vld [vmem:[%s345 + $0x148] sm:$0xff]
        %v735 = vld [vmem:[%s345 + $0x150] sm:$0xff]
        %v736 = vld [vmem:[%s345 + $0x158] sm:$0xff]
        %v737 = vld [vmem:[%s345 + $0x160] sm:$0xff]
        %v738 = vld [vmem:[%s345 + $0x168] sm:$0xff]
        %v739 = vld [vmem:[%s345 + $0x170] sm:$0xff]
        %v740 = vld [vmem:[%s345 + $0x178] sm:$0xff]
        %v741 = vld [vmem:[%s345 + $0x180] sm:$0xff]
        %v742 = vld [vmem:[%s345 + $0x188] sm:$0xff]
        %v743 = vld [vmem:[%s345 + $0x190] sm:$0xff]
        %v744 = vld [vmem:[%s345 + $0x198] sm:$0xff]
        %v745 = vld [vmem:[%s345 + $0x1a0] sm:$0xff]
        %v746 = vld [vmem:[%s345 + $0x1a8] sm:$0xff]
        %v747 = vld [vmem:[%s345 + $0x1b0] sm:$0xff]
        %v748 = vld [vmem:[%s345 + $0x1b8] sm:$0xff]
        %v749 = vld [vmem:[%s345 + $0x1c0] sm:$0xff]
        %v750 = vld [vmem:[%s345 + $0x1c8] sm:$0xff]
        %v751 = vld [vmem:[%s345 + $0x1d0] sm:$0xff]
        %v752 = vld [vmem:[%s345 + $0x1d8] sm:$0xff]
        %v753 = vld [vmem:[%s345 + $0x1e0] sm:$0xff]
        %v754 = vld [vmem:[%s345 + $0x1e8] sm:$0xff]
        %v755 = vld [vmem:[%s345 + $0x1f0] sm:$0xff]
        %v756 = vld [vmem:[%s345 + $0x1f8] sm:$0xff]
        %v757 = vld [vmem:[#allocation3] sm:$0xff]
        %v758 = vld [vmem:[#allocation3 + $0x8] sm:$0xff]
        %v759 = vld [vmem:[#allocation3 + $0x10] sm:$0xff]
        %v760 = vld [vmem:[#allocation3 + $0x18] sm:$0xff]
        %761 = vmatpush.msra.mxu0 %v753
        %762 = vmatpush.msra.mxu0 %v749
        %763 = vmatpush.msra.mxu0 %v745
        %764 = vmatpush.msra.mxu0 %v741
        %765 = vmatpush.msra.mxu0 %v737
        %766 = vmatpush.msra.mxu0 %v733
        %767 = vmatpush.msra.mxu0 %v729
        %768 = vmatpush.msra.mxu0 %v725
        %769 = vmatpush.msra.mxu0 %v721
        %770 = vmatpush.msra.mxu0 %v717
        %771 = vmatpush.msra.mxu0 %v713
        %772 = vmatpush.msra.mxu0 %v709
        %773 = vmatpush.msra.mxu0 %v705
        %774 = vmatpush.msra.mxu0 %v701
        %775 = vmatpush.msra.mxu0 %v697
        %776 = vmatpush.msra.mxu0 %v693
        %777 = vmatmul.f32.gmra.mxu0 0.0
        %v778 = vpop.f32.mrf.mxu0
        %v779 = vadd.f32 0.0, %v778
        %780 = vdwg.mxu0
        %781 = vmatpush.msra.mxu0 %v754
        %782 = vmatpush.msra.mxu0 %v750
        %783 = vmatpush.msra.mxu0 %v746
        %784 = vmatpush.msra.mxu0 %v742
        %785 = vmatpush.msra.mxu0 %v738
        %786 = vmatpush.msra.mxu0 %v734
        %787 = vmatpush.msra.mxu0 %v730
        %788 = vmatpush.msra.mxu0 %v726
        %789 = vmatpush.msra.mxu0 %v722
        %790 = vmatpush.msra.mxu0 %v718
        %791 = vmatpush.msra.mxu0 %v714
        %792 = vmatpush.msra.mxu0 %v710
        %793 = vmatpush.msra.mxu0 %v706
        %794 = vmatpush.msra.mxu0 %v702
        %795 = vmatpush.msra.mxu0 %v698
        %796 = vmatpush.msra.mxu0 %v694
        %797 = vmatmul.f32.gmra.mxu0 0.0
        %v798 = vpop.f32.mrf.mxu0
        %v799 = vadd.f32 0.0, %v798
        %800 = vdwg.mxu0
        %801 = vmatpush.msra.mxu0 %v755
        %802 = vmatpush.msra.mxu0 %v751
        %803 = vmatpush.msra.mxu0 %v747
        %804 = vmatpush.msra.mxu0 %v743
        %805 = vmatpush.msra.mxu0 %v739
        %806 = vmatpush.msra.mxu0 %v735
        %807 = vmatpush.msra.mxu0 %v731
        %808 = vmatpush.msra.mxu0 %v727
        %809 = vmatpush.msra.mxu0 %v723
        %810 = vmatpush.msra.mxu0 %v719
        %811 = vmatpush.msra.mxu0 %v715
        %812 = vmatpush.msra.mxu0 %v711
        %813 = vmatpush.msra.mxu0 %v707
        %814 = vmatpush.msra.mxu0 %v703
        %815 = vmatpush.msra.mxu0 %v699
        %816 = vmatpush.msra.mxu0 %v695
        %817 = vmatmul.f32.gmra.mxu0 0.0
        %v818 = vpop.f32.mrf.mxu0
        %v819 = vadd.f32 0.0, %v818
        %820 = vdwg.mxu0
        %821 = vmatpush.msra.mxu0 %v756
        %822 = vmatpush.msra.mxu0 %v752
        %823 = vmatpush.msra.mxu0 %v748
        %824 = vmatpush.msra.mxu0 %v744
        %825 = vmatpush.msra.mxu0 %v740
        %826 = vmatpush.msra.mxu0 %v736
        %827 = vmatpush.msra.mxu0 %v732
        %828 = vmatpush.msra.mxu0 %v728
        %829 = vmatpush.msra.mxu0 %v724
        %830 = vmatpush.msra.mxu0 %v720
        %831 = vmatpush.msra.mxu0 %v716
        %832 = vmatpush.msra.mxu0 %v712
        %833 = vmatpush.msra.mxu0 %v708
        %834 = vmatpush.msra.mxu0 %v704
        %835 = vmatpush.msra.mxu0 %v700
        %836 = vmatpush.msra.mxu0 %v696
        %837 = vmatmul.f32.gmra.mxu0 0.0
        %v838 = vpop.f32.mrf.mxu0
        %v839 = vadd.f32 0.0, %v838
        %840 = vdwg.mxu0
        %v841 = vadd.f32 %v757, %v779
        %v842 = vadd.f32 %v758, %v799
        %v843 = vadd.f32 %v759, %v819
        %v844 = vadd.f32 %v760, %v839
        %v845 = vxor.u32 %v841, 2147483648
        %v846 = vxor.u32 %v842, 2147483648
        %v847 = vxor.u32 %v843, 2147483648
        %v848 = vmul.f32 %v845, 1.442695
        %v849 = vpow.pop %v848
        %v850 = vmul.f32 %v846, 1.442695
        %v851 = vpow.pop %v850
        %v852 = vmul.f32 %v847, 1.442695
        %v853 = vpow.pop %v852
        %v854 = vadd.f32 %v849, 1.0
        %v855 = vadd.f32 %v851, 1.0
        %v856 = vadd.f32 %v853, 1.0
        %v857 = vrcp.pop %v854
        %v858 = vmul.f32 %v854, %v857
        %v859 = vsub.f32 1.0, %v858
        %v860 = vmul.f32 %v857, %v859
        %v861 = vadd.f32 %v857, %v860
        %vm862 = vweird.f32 %v854
        %vm863 = vweird.f32 %v857
        %vm864 = vmor %vm862, %vm863
        %v865 = vsel %vm864, %v857, %v861
        %v866 = vand.u32 2147483647, %v854
        %vm867 = vcmp.eq.f32.partialorder %v866, 8.507059e+37
        %v868 = vand.u32 %v854, 2147483648
        %v869 = vor.u32 1.1754944e-38, %v868
        %v870 = vsel %vm867, %v869, %v865
        %v871 = vmul.f32 1.0, %v870
        %v872 = vrcp.pop %v855
        %v873 = vmul.f32 %v855, %v872
        %v874 = vsub.f32 1.0, %v873
        %v875 = vmul.f32 %v872, %v874
        %v876 = vadd.f32 %v872, %v875
        %vm877 = vweird.f32 %v855
        %vm878 = vweird.f32 %v872
        %vm879 = vmor %vm877, %vm878
        %v880 = vsel %vm879, %v872, %v876
        %v881 = vand.u32 2147483647, %v855
        %vm882 = vcmp.eq.f32.partialorder %v881, 8.507059e+37
        %v883 = vand.u32 %v855, 2147483648
        %v884 = vor.u32 1.1754944e-38, %v883
        %v885 = vsel %vm882, %v884, %v880
        %v886 = vmul.f32 1.0, %v885
        %v887 = vrcp.pop %v856
        %v888 = vmul.f32 %v856, %v887
        %v889 = vsub.f32 1.0, %v888
        %v890 = vmul.f32 %v887, %v889
        %v891 = vadd.f32 %v887, %v890
        %vm892 = vweird.f32 %v856
        %vm893 = vweird.f32 %v887
        %vm894 = vmor %vm892, %vm893
        %v895 = vsel %vm894, %v887, %v891
        %v896 = vand.u32 2147483647, %v856
        %vm897 = vcmp.eq.f32.partialorder %v896, 8.507059e+37
        %v898 = vand.u32 %v856, 2147483648
        %v899 = vor.u32 1.1754944e-38, %v898
        %v900 = vsel %vm897, %v899, %v895
        %v901 = vmul.f32 1.0, %v900
        %v902 = vtanh.pop %v844
        %v903 = vmul.f32 %v886, 0.0
        %v904 = vmul.f32 %v871, %v902
        %v905 = vadd.f32 %v903, %v904
        %v906 = vtanh.pop %v905
        %v907 = vmul.f32 %v901, %v906
        %908 = vst [vmem:[#allocation2] sm:$0xff] %v907
        %s909 = scalar_lea.vmem [#allocation3], 32
        %v910 = vld [vmem:[%s909] sm:$0xff]
        %v911 = vld [vmem:[%s909 + $0x8] sm:$0xff]
        %v912 = vld [vmem:[%s909 + $0x10] sm:$0xff]
        %v913 = vld [vmem:[%s909 + $0x18] sm:$0xff]
        %914 = vmatpush.msra.mxu0 %v753
        %915 = vmatpush.msra.mxu0 %v749
        %916 = vmatpush.msra.mxu0 %v745
        %917 = vmatpush.msra.mxu0 %v741
        %918 = vmatpush.msra.mxu0 %v737
        %919 = vmatpush.msra.mxu0 %v733
        %920 = vmatpush.msra.mxu0 %v729
        %921 = vmatpush.msra.mxu0 %v725
        %922 = vmatpush.msra.mxu0 %v721
        %923 = vmatpush.msra.mxu0 %v717
        %924 = vmatpush.msra.mxu0 %v713
        %925 = vmatpush.msra.mxu0 %v709
        %926 = vmatpush.msra.mxu0 %v705
        %927 = vmatpush.msra.mxu0 %v701
        %928 = vmatpush.msra.mxu0 %v697
        %929 = vmatpush.msra.mxu0 %v693
        %930 = vmatmul.f32.gmra.mxu0 %v907
        %v931 = vpop.f32.mrf.mxu0
        %v932 = vadd.f32 0.0, %v931
        %933 = vdwg.mxu0
        %934 = vmatpush.msra.mxu0 %v754
        %935 = vmatpush.msra.mxu0 %v750
        %936 = vmatpush.msra.mxu0 %v746
        %937 = vmatpush.msra.mxu0 %v742
        %938 = vmatpush.msra.mxu0 %v738
        %939 = vmatpush.msra.mxu0 %v734
        %940 = vmatpush.msra.mxu0 %v730
        %941 = vmatpush.msra.mxu0 %v726
        %942 = vmatpush.msra.mxu0 %v722
        %943 = vmatpush.msra.mxu0 %v718
        %944 = vmatpush.msra.mxu0 %v714
        %945 = vmatpush.msra.mxu0 %v710
        %946 = vmatpush.msra.mxu0 %v706
        %947 = vmatpush.msra.mxu0 %v702
        %948 = vmatpush.msra.mxu0 %v698
        %949 = vmatpush.msra.mxu0 %v694
        %950 = vmatmul.f32.gmra.mxu0 %v907
        %v951 = vpop.f32.mrf.mxu0
        %v952 = vadd.f32 0.0, %v951
        %953 = vdwg.mxu0
        %954 = vmatpush.msra.mxu0 %v755
        %955 = vmatpush.msra.mxu0 %v751
        %956 = vmatpush.msra.mxu0 %v747
        %957 = vmatpush.msra.mxu0 %v743
        %958 = vmatpush.msra.mxu0 %v739
        %959 = vmatpush.msra.mxu0 %v735
        %960 = vmatpush.msra.mxu0 %v731
        %961 = vmatpush.msra.mxu0 %v727
        %962 = vmatpush.msra.mxu0 %v723
        %963 = vmatpush.msra.mxu0 %v719
        %964 = vmatpush.msra.mxu0 %v715
        %965 = vmatpush.msra.mxu0 %v711
        %966 = vmatpush.msra.mxu0 %v707
        %967 = vmatpush.msra.mxu0 %v703
        %968 = vmatpush.msra.mxu0 %v699
        %969 = vmatpush.msra.mxu0 %v695
        %970 = vmatmul.f32.gmra.mxu0 %v907
        %v971 = vpop.f32.mrf.mxu0
        %v972 = vadd.f32 0.0, %v971
        %973 = vdwg.mxu0
        %974 = vmatpush.msra.mxu0 %v756
        %975 = vmatpush.msra.mxu0 %v752
        %976 = vmatpush.msra.mxu0 %v748
        %977 = vmatpush.msra.mxu0 %v744
        %978 = vmatpush.msra.mxu0 %v740
        %979 = vmatpush.msra.mxu0 %v736
        %980 = vmatpush.msra.mxu0 %v732
        %981 = vmatpush.msra.mxu0 %v728
        %982 = vmatpush.msra.mxu0 %v724
        %983 = vmatpush.msra.mxu0 %v720
        %984 = vmatpush.msra.mxu0 %v716
        %985 = vmatpush.msra.mxu0 %v712
        %986 = vmatpush.msra.mxu0 %v708
        %987 = vmatpush.msra.mxu0 %v704
        %988 = vmatpush.msra.mxu0 %v700
        %989 = vmatpush.msra.mxu0 %v696
        %990 = vmatmul.f32.gmra.mxu0 %v907
        %v991 = vpop.f32.mrf.mxu0
        %v992 = vadd.f32 0.0, %v991
        %993 = vdwg.mxu0
        %v994 = vadd.f32 %v910, %v932
        %v995 = vadd.f32 %v911, %v952
        %v996 = vadd.f32 %v912, %v972
        %v997 = vadd.f32 %v913, %v992
        %v998 = vxor.u32 %v994, 2147483648
        %v999 = vxor.u32 %v995, 2147483648
        %v1000 = vxor.u32 %v996, 2147483648
        %v1001 = vmul.f32 %v998, 1.442695
        %v1002 = vpow.pop %v1001
        %v1003 = vmul.f32 %v999, 1.442695
        %v1004 = vpow.pop %v1003
        %v1005 = vmul.f32 %v1000, 1.442695
        %v1006 = vpow.pop %v1005
        %v1007 = vadd.f32 %v1002, 1.0
        %v1008 = vadd.f32 %v1004, 1.0
        %v1009 = vadd.f32 %v1006, 1.0
        %v1010 = vrcp.pop %v1007
        %v1011 = vmul.f32 %v1007, %v1010
        %v1012 = vsub.f32 1.0, %v1011
        %v1013 = vmul.f32 %v1010, %v1012
        %v1014 = vadd.f32 %v1010, %v1013
        %vm1015 = vweird.f32 %v1007
        %vm1016 = vweird.f32 %v1010
        %vm1017 = vmor %vm1015, %vm1016
        %v1018 = vsel %vm1017, %v1010, %v1014
        %v1019 = vand.u32 2147483647, %v1007
        %vm1020 = vcmp.eq.f32.partialorder %v1019, 8.507059e+37
        %v1021 = vand.u32 %v1007, 2147483648
        %v1022 = vor.u32 1.1754944e-38, %v1021
        %v1023 = vsel %vm1020, %v1022, %v1018
        %v1024 = vmul.f32 1.0, %v1023
        %v1025 = vrcp.pop %v1008
        %v1026 = vmul.f32 %v1008, %v1025
        %v1027 = vsub.f32 1.0, %v1026
        %v1028 = vmul.f32 %v1025, %v1027
        %v1029 = vadd.f32 %v1025, %v1028
        %vm1030 = vweird.f32 %v1008
        %vm1031 = vweird.f32 %v1025
        %vm1032 = vmor %vm1030, %vm1031
        %v1033 = vsel %vm1032, %v1025, %v1029
        %v1034 = vand.u32 2147483647, %v1008
        %vm1035 = vcmp.eq.f32.partialorder %v1034, 8.507059e+37
        %v1036 = vand.u32 %v1008, 2147483648
        %v1037 = vor.u32 1.1754944e-38, %v1036
        %v1038 = vsel %vm1035, %v1037, %v1033
        %v1039 = vmul.f32 1.0, %v1038
        %v1040 = vrcp.pop %v1009
        %v1041 = vmul.f32 %v1009, %v1040
        %v1042 = vsub.f32 1.0, %v1041
        %v1043 = vmul.f32 %v1040, %v1042
        %v1044 = vadd.f32 %v1040, %v1043
        %vm1045 = vweird.f32 %v1009
        %vm1046 = vweird.f32 %v1040
        %vm1047 = vmor %vm1045, %vm1046
        %v1048 = vsel %vm1047, %v1040, %v1044
        %v1049 = vand.u32 2147483647, %v1009
        %vm1050 = vcmp.eq.f32.partialorder %v1049, 8.507059e+37
        %v1051 = vand.u32 %v1009, 2147483648
        %v1052 = vor.u32 1.1754944e-38, %v1051
        %v1053 = vsel %vm1050, %v1052, %v1048
        %v1054 = vmul.f32 1.0, %v1053
        %v1055 = vtanh.pop %v997
        %v1056 = vmul.f32 %v1039, %v905
        %v1057 = vmul.f32 %v1024, %v1055
        %v1058 = vadd.f32 %v1056, %v1057
        %v1059 = vtanh.pop %v1058
        %v1060 = vmul.f32 %v1054, %v1059
        %s1061 = scalar_lea.vmem [#allocation2], 8
        %1062 = vst [vmem:[%s1061] sm:$0xff] %v1060
        %s1063 = scalar_lea.vmem [#allocation3], 64
        %v1064 = vld [vmem:[%s1063] sm:$0xff]
        %v1065 = vld [vmem:[%s1063 + $0x8] sm:$0xff]
        %v1066 = vld [vmem:[%s1063 + $0x10] sm:$0xff]
        %v1067 = vld [vmem:[%s1063 + $0x18] sm:$0xff]
        %1068 = vmatpush.msra.mxu0 %v753
        %1069 = vmatpush.msra.mxu0 %v749
        %1070 = vmatpush.msra.mxu0 %v745
        %1071 = vmatpush.msra.mxu0 %v741
        %1072 = vmatpush.msra.mxu0 %v737
        %1073 = vmatpush.msra.mxu0 %v733
        %1074 = vmatpush.msra.mxu0 %v729
        %1075 = vmatpush.msra.mxu0 %v725
        %1076 = vmatpush.msra.mxu0 %v721
        %1077 = vmatpush.msra.mxu0 %v717
        %1078 = vmatpush.msra.mxu0 %v713
        %1079 = vmatpush.msra.mxu0 %v709
        %1080 = vmatpush.msra.mxu0 %v705
        %1081 = vmatpush.msra.mxu0 %v701
        %1082 = vmatpush.msra.mxu0 %v697
        %1083 = vmatpush.msra.mxu0 %v693
        %1084 = vmatmul.f32.gmra.mxu0 %v1060
        %v1085 = vpop.f32.mrf.mxu0
        %v1086 = vadd.f32 0.0, %v1085
        %1087 = vdwg.mxu0
        %1088 = vmatpush.msra.mxu0 %v754
        %1089 = vmatpush.msra.mxu0 %v750
        %1090 = vmatpush.msra.mxu0 %v746
        %1091 = vmatpush.msra.mxu0 %v742
        %1092 = vmatpush.msra.mxu0 %v738
        %1093 = vmatpush.msra.mxu0 %v734
        %1094 = vmatpush.msra.mxu0 %v730
        %1095 = vmatpush.msra.mxu0 %v726
        %1096 = vmatpush.msra.mxu0 %v722
        %1097 = vmatpush.msra.mxu0 %v718
        %1098 = vmatpush.msra.mxu0 %v714
        %1099 = vmatpush.msra.mxu0 %v710
        %1100 = vmatpush.msra.mxu0 %v706
        %1101 = vmatpush.msra.mxu0 %v702
        %1102 = vmatpush.msra.mxu0 %v698
        %1103 = vmatpush.msra.mxu0 %v694
        %1104 = vmatmul.f32.gmra.mxu0 %v1060
        %v1105 = vpop.f32.mrf.mxu0
        %v1106 = vadd.f32 0.0, %v1105
        %1107 = vdwg.mxu0
        %1108 = vmatpush.msra.mxu0 %v755
        %1109 = vmatpush.msra.mxu0 %v751
        %1110 = vmatpush.msra.mxu0 %v747
        %1111 = vmatpush.msra.mxu0 %v743
        %1112 = vmatpush.msra.mxu0 %v739
        %1113 = vmatpush.msra.mxu0 %v735
        %1114 = vmatpush.msra.mxu0 %v731
        %1115 = vmatpush.msra.mxu0 %v727
        %1116 = vmatpush.msra.mxu0 %v723
        %1117 = vmatpush.msra.mxu0 %v719
        %1118 = vmatpush.msra.mxu0 %v715
        %1119 = vmatpush.msra.mxu0 %v711
        %1120 = vmatpush.msra.mxu0 %v707
        %1121 = vmatpush.msra.mxu0 %v703
        %1122 = vmatpush.msra.mxu0 %v699
        %1123 = vmatpush.msra.mxu0 %v695
        %1124 = vmatmul.f32.gmra.mxu0 %v1060
        %v1125 = vpop.f32.mrf.mxu0
        %v1126 = vadd.f32 0.0, %v1125
        %1127 = vdwg.mxu0
        %1128 = vmatpush.msra.mxu0 %v756
        %1129 = vmatpush.msra.mxu0 %v752
        %1130 = vmatpush.msra.mxu0 %v748
        %1131 = vmatpush.msra.mxu0 %v744
        %1132 = vmatpush.msra.mxu0 %v740
        %1133 = vmatpush.msra.mxu0 %v736
        %1134 = vmatpush.msra.mxu0 %v732
        %1135 = vmatpush.msra.mxu0 %v728
        %1136 = vmatpush.msra.mxu0 %v724
        %1137 = vmatpush.msra.mxu0 %v720
        %1138 = vmatpush.msra.mxu0 %v716
        %1139 = vmatpush.msra.mxu0 %v712
        %1140 = vmatpush.msra.mxu0 %v708
        %1141 = vmatpush.msra.mxu0 %v704
        %1142 = vmatpush.msra.mxu0 %v700
        %1143 = vmatpush.msra.mxu0 %v696
        %1144 = vmatmul.f32.gmra.mxu0 %v1060
        %v1145 = vpop.f32.mrf.mxu0
        %v1146 = vadd.f32 0.0, %v1145
        %1147 = vdwg.mxu0
        %v1148 = vadd.f32 %v1064, %v1086
        %v1149 = vadd.f32 %v1065, %v1106
        %v1150 = vadd.f32 %v1066, %v1126
        %v1151 = vadd.f32 %v1067, %v1146
        %v1152 = vxor.u32 %v1148, 2147483648
        %v1153 = vxor.u32 %v1149, 2147483648
        %v1154 = vxor.u32 %v1150, 2147483648
        %v1155 = vmul.f32 %v1152, 1.442695
        %v1156 = vpow.pop %v1155
        %v1157 = vmul.f32 %v1153, 1.442695
        %v1158 = vpow.pop %v1157
        %v1159 = vmul.f32 %v1154, 1.442695
        %v1160 = vpow.pop %v1159
        %v1161 = vadd.f32 %v1156, 1.0
        %v1162 = vadd.f32 %v1158, 1.0
        %v1163 = vadd.f32 %v1160, 1.0
        %v1164 = vrcp.pop %v1161
        %v1165 = vmul.f32 %v1161, %v1164
        %v1166 = vsub.f32 1.0, %v1165
        %v1167 = vmul.f32 %v1164, %v1166
        %v1168 = vadd.f32 %v1164, %v1167
        %vm1169 = vweird.f32 %v1161
        %vm1170 = vweird.f32 %v1164
        %vm1171 = vmor %vm1169, %vm1170
        %v1172 = vsel %vm1171, %v1164, %v1168
        %v1173 = vand.u32 2147483647, %v1161
        %vm1174 = vcmp.eq.f32.partialorder %v1173, 8.507059e+37
        %v1175 = vand.u32 %v1161, 2147483648
        %v1176 = vor.u32 1.1754944e-38, %v1175
        %v1177 = vsel %vm1174, %v1176, %v1172
        %v1178 = vmul.f32 1.0, %v1177
        %v1179 = vrcp.pop %v1162
        %v1180 = vmul.f32 %v1162, %v1179
        %v1181 = vsub.f32 1.0, %v1180
        %v1182 = vmul.f32 %v1179, %v1181
        %v1183 = vadd.f32 %v1179, %v1182
        %vm1184 = vweird.f32 %v1162
        %vm1185 = vweird.f32 %v1179
        %vm1186 = vmor %vm1184, %vm1185
        %v1187 = vsel %vm1186, %v1179, %v1183
        %v1188 = vand.u32 2147483647, %v1162
        %vm1189 = vcmp.eq.f32.partialorder %v1188, 8.507059e+37
        %v1190 = vand.u32 %v1162, 2147483648
        %v1191 = vor.u32 1.1754944e-38, %v1190
        %v1192 = vsel %vm1189, %v1191, %v1187
        %v1193 = vmul.f32 1.0, %v1192
        %v1194 = vrcp.pop %v1163
        %v1195 = vmul.f32 %v1163, %v1194
        %v1196 = vsub.f32 1.0, %v1195
        %v1197 = vmul.f32 %v1194, %v1196
        %v1198 = vadd.f32 %v1194, %v1197
        %vm1199 = vweird.f32 %v1163
        %vm1200 = vweird.f32 %v1194
        %vm1201 = vmor %vm1199, %vm1200
        %v1202 = vsel %vm1201, %v1194, %v1198
        %v1203 = vand.u32 2147483647, %v1163
        %vm1204 = vcmp.eq.f32.partialorder %v1203, 8.507059e+37
        %v1205 = vand.u32 %v1163, 2147483648
        %v1206 = vor.u32 1.1754944e-38, %v1205
        %v1207 = vsel %vm1204, %v1206, %v1202
        %v1208 = vmul.f32 1.0, %v1207
        %v1209 = vtanh.pop %v1151
        %v1210 = vmul.f32 %v1193, %v1058
        %v1211 = vmul.f32 %v1178, %v1209
        %v1212 = vadd.f32 %v1210, %v1211
        %v1213 = vtanh.pop %v1212
        %v1214 = vmul.f32 %v1208, %v1213
        %s1215 = scalar_lea.vmem [#allocation2], 16
        %1216 = vst [vmem:[%s1215] sm:$0xff] %v1214
        %s1217 = scalar_lea.vmem [#allocation3], 96
        %v1218 = vld [vmem:[%s1217] sm:$0xff]
        %v1219 = vld [vmem:[%s1217 + $0x8] sm:$0xff]
        %v1220 = vld [vmem:[%s1217 + $0x10] sm:$0xff]
        %v1221 = vld [vmem:[%s1217 + $0x18] sm:$0xff]
        %1222 = vmatpush.msra.mxu0 %v753
        %1223 = vmatpush.msra.mxu0 %v749
        %1224 = vmatpush.msra.mxu0 %v745
        %1225 = vmatpush.msra.mxu0 %v741
        %1226 = vmatpush.msra.mxu0 %v737
        %1227 = vmatpush.msra.mxu0 %v733
        %1228 = vmatpush.msra.mxu0 %v729
        %1229 = vmatpush.msra.mxu0 %v725
        %1230 = vmatpush.msra.mxu0 %v721
        %1231 = vmatpush.msra.mxu0 %v717
        %1232 = vmatpush.msra.mxu0 %v713
        %1233 = vmatpush.msra.mxu0 %v709
        %1234 = vmatpush.msra.mxu0 %v705
        %1235 = vmatpush.msra.mxu0 %v701
        %1236 = vmatpush.msra.mxu0 %v697
        %1237 = vmatpush.msra.mxu0 %v693
        %1238 = vmatmul.f32.gmra.mxu0 %v1214
        %v1239 = vpop.f32.mrf.mxu0
        %v1240 = vadd.f32 0.0, %v1239
        %1241 = vdwg.mxu0
        %1242 = vmatpush.msra.mxu0 %v754
        %1243 = vmatpush.msra.mxu0 %v750
        %1244 = vmatpush.msra.mxu0 %v746
        %1245 = vmatpush.msra.mxu0 %v742
        %1246 = vmatpush.msra.mxu0 %v738
        %1247 = vmatpush.msra.mxu0 %v734
        %1248 = vmatpush.msra.mxu0 %v730
        %1249 = vmatpush.msra.mxu0 %v726
        %1250 = vmatpush.msra.mxu0 %v722
        %1251 = vmatpush.msra.mxu0 %v718
        %1252 = vmatpush.msra.mxu0 %v714
        %1253 = vmatpush.msra.mxu0 %v710
        %1254 = vmatpush.msra.mxu0 %v706
        %1255 = vmatpush.msra.mxu0 %v702
        %1256 = vmatpush.msra.mxu0 %v698
        %1257 = vmatpush.msra.mxu0 %v694
        %1258 = vmatmul.f32.gmra.mxu0 %v1214
        %v1259 = vpop.f32.mrf.mxu0
        %v1260 = vadd.f32 0.0, %v1259
        %1261 = vdwg.mxu0
        %1262 = vmatpush.msra.mxu0 %v755
        %1263 = vmatpush.msra.mxu0 %v751
        %1264 = vmatpush.msra.mxu0 %v747
        %1265 = vmatpush.msra.mxu0 %v743
        %1266 = vmatpush.msra.mxu0 %v739
        %1267 = vmatpush.msra.mxu0 %v735
        %1268 = vmatpush.msra.mxu0 %v731
        %1269 = vmatpush.msra.mxu0 %v727
        %1270 = vmatpush.msra.mxu0 %v723
        %1271 = vmatpush.msra.mxu0 %v719
        %1272 = vmatpush.msra.mxu0 %v715
        %1273 = vmatpush.msra.mxu0 %v711
        %1274 = vmatpush.msra.mxu0 %v707
        %1275 = vmatpush.msra.mxu0 %v703
        %1276 = vmatpush.msra.mxu0 %v699
        %1277 = vmatpush.msra.mxu0 %v695
        %1278 = vmatmul.f32.gmra.mxu0 %v1214
        %v1279 = vpop.f32.mrf.mxu0
        %v1280 = vadd.f32 0.0, %v1279
        %1281 = vdwg.mxu0
        %1282 = vmatpush.msra.mxu0 %v756
        %1283 = vmatpush.msra.mxu0 %v752
        %1284 = vmatpush.msra.mxu0 %v748
        %1285 = vmatpush.msra.mxu0 %v744
        %1286 = vmatpush.msra.mxu0 %v740
        %1287 = vmatpush.msra.mxu0 %v736
        %1288 = vmatpush.msra.mxu0 %v732
        %1289 = vmatpush.msra.mxu0 %v728
        %1290 = vmatpush.msra.mxu0 %v724
        %1291 = vmatpush.msra.mxu0 %v720
        %1292 = vmatpush.msra.mxu0 %v716
        %1293 = vmatpush.msra.mxu0 %v712
        %1294 = vmatpush.msra.mxu0 %v708
        %1295 = vmatpush.msra.mxu0 %v704
        %1296 = vmatpush.msra.mxu0 %v700
        %1297 = vmatpush.msra.mxu0 %v696
        %1298 = vmatmul.f32.gmra.mxu0 %v1214
        %v1299 = vpop.f32.mrf.mxu0
        %v1300 = vadd.f32 0.0, %v1299
        %1301 = vdwg.mxu0
        %v1302 = vadd.f32 %v1218, %v1240
        %v1303 = vadd.f32 %v1219, %v1260
        %v1304 = vadd.f32 %v1220, %v1280
        %v1305 = vadd.f32 %v1221, %v1300
        %v1306 = vxor.u32 %v1302, 2147483648
        %v1307 = vxor.u32 %v1303, 2147483648
        %v1308 = vxor.u32 %v1304, 2147483648
        %v1309 = vmul.f32 %v1306, 1.442695
        %v1310 = vpow.pop %v1309
        %v1311 = vmul.f32 %v1307, 1.442695
        %v1312 = vpow.pop %v1311
        %v1313 = vmul.f32 %v1308, 1.442695
        %v1314 = vpow.pop %v1313
        %v1315 = vadd.f32 %v1310, 1.0
        %v1316 = vadd.f32 %v1312, 1.0
        %v1317 = vadd.f32 %v1314, 1.0
        %v1318 = vrcp.pop %v1315
        %v1319 = vmul.f32 %v1315, %v1318
        %v1320 = vsub.f32 1.0, %v1319
        %v1321 = vmul.f32 %v1318, %v1320
        %v1322 = vadd.f32 %v1318, %v1321
        %vm1323 = vweird.f32 %v1315
        %vm1324 = vweird.f32 %v1318
        %vm1325 = vmor %vm1323, %vm1324
        %v1326 = vsel %vm1325, %v1318, %v1322
        %v1327 = vand.u32 2147483647, %v1315
        %vm1328 = vcmp.eq.f32.partialorder %v1327, 8.507059e+37
        %v1329 = vand.u32 %v1315, 2147483648
        %v1330 = vor.u32 1.1754944e-38, %v1329
        %v1331 = vsel %vm1328, %v1330, %v1326
        %v1332 = vmul.f32 1.0, %v1331
        %v1333 = vrcp.pop %v1316
        %v1334 = vmul.f32 %v1316, %v1333
        %v1335 = vsub.f32 1.0, %v1334
        %v1336 = vmul.f32 %v1333, %v1335
        %v1337 = vadd.f32 %v1333, %v1336
        %vm1338 = vweird.f32 %v1316
        %vm1339 = vweird.f32 %v1333
        %vm1340 = vmor %vm1338, %vm1339
        %v1341 = vsel %vm1340, %v1333, %v1337
        %v1342 = vand.u32 2147483647, %v1316
        %vm1343 = vcmp.eq.f32.partialorder %v1342, 8.507059e+37
        %v1344 = vand.u32 %v1316, 2147483648
        %v1345 = vor.u32 1.1754944e-38, %v1344
        %v1346 = vsel %vm1343, %v1345, %v1341
        %v1347 = vmul.f32 1.0, %v1346
        %v1348 = vrcp.pop %v1317
        %v1349 = vmul.f32 %v1317, %v1348
        %v1350 = vsub.f32 1.0, %v1349
        %v1351 = vmul.f32 %v1348, %v1350
        %v1352 = vadd.f32 %v1348, %v1351
        %vm1353 = vweird.f32 %v1317
        %vm1354 = vweird.f32 %v1348
        %vm1355 = vmor %vm1353, %vm1354
        %v1356 = vsel %vm1355, %v1348, %v1352
        %v1357 = vand.u32 2147483647, %v1317
        %vm1358 = vcmp.eq.f32.partialorder %v1357, 8.507059e+37
        %v1359 = vand.u32 %v1317, 2147483648
        %v1360 = vor.u32 1.1754944e-38, %v1359
        %v1361 = vsel %vm1358, %v1360, %v1356
        %v1362 = vmul.f32 1.0, %v1361
        %v1363 = vtanh.pop %v1305
        %v1364 = vmul.f32 %v1347, %v1212
        %v1365 = vmul.f32 %v1332, %v1363
        %v1366 = vadd.f32 %v1364, %v1365
        %v1367 = vtanh.pop %v1366
        %v1368 = vmul.f32 %v1362, %v1367
        %s1369 = scalar_lea.vmem [#allocation2], 24
        %1370 = vst [vmem:[%s1369] sm:$0xff] %v1368
        %s1371 = scalar_lea.vmem [#allocation3], 128
        %v1372 = vld [vmem:[%s1371] sm:$0xff]
        %v1373 = vld [vmem:[%s1371 + $0x8] sm:$0xff]
        %v1374 = vld [vmem:[%s1371 + $0x10] sm:$0xff]
        %v1375 = vld [vmem:[%s1371 + $0x18] sm:$0xff]
        %1376 = vmatpush.msra.mxu0 %v753
        %1377 = vmatpush.msra.mxu0 %v749
        %1378 = vmatpush.msra.mxu0 %v745
        %1379 = vmatpush.msra.mxu0 %v741
        %1380 = vmatpush.msra.mxu0 %v737
        %1381 = vmatpush.msra.mxu0 %v733
        %1382 = vmatpush.msra.mxu0 %v729
        %1383 = vmatpush.msra.mxu0 %v725
        %1384 = vmatpush.msra.mxu0 %v721
        %1385 = vmatpush.msra.mxu0 %v717
        %1386 = vmatpush.msra.mxu0 %v713
        %1387 = vmatpush.msra.mxu0 %v709
        %1388 = vmatpush.msra.mxu0 %v705
        %1389 = vmatpush.msra.mxu0 %v701
        %1390 = vmatpush.msra.mxu0 %v697
        %1391 = vmatpush.msra.mxu0 %v693
        %1392 = vmatmul.f32.gmra.mxu0 %v1368
        %v1393 = vpop.f32.mrf.mxu0
        %v1394 = vadd.f32 0.0, %v1393
        %1395 = vdwg.mxu0
        %1396 = vmatpush.msra.mxu0 %v754
        %1397 = vmatpush.msra.mxu0 %v750
        %1398 = vmatpush.msra.mxu0 %v746
        %1399 = vmatpush.msra.mxu0 %v742
        %1400 = vmatpush.msra.mxu0 %v738
        %1401 = vmatpush.msra.mxu0 %v734
        %1402 = vmatpush.msra.mxu0 %v730
        %1403 = vmatpush.msra.mxu0 %v726
        %1404 = vmatpush.msra.mxu0 %v722
        %1405 = vmatpush.msra.mxu0 %v718
        %1406 = vmatpush.msra.mxu0 %v714
        %1407 = vmatpush.msra.mxu0 %v710
        %1408 = vmatpush.msra.mxu0 %v706
        %1409 = vmatpush.msra.mxu0 %v702
        %1410 = vmatpush.msra.mxu0 %v698
        %1411 = vmatpush.msra.mxu0 %v694
        %1412 = vmatmul.f32.gmra.mxu0 %v1368
        %v1413 = vpop.f32.mrf.mxu0
        %v1414 = vadd.f32 0.0, %v1413
        %1415 = vdwg.mxu0
        %1416 = vmatpush.msra.mxu0 %v755
        %1417 = vmatpush.msra.mxu0 %v751
        %1418 = vmatpush.msra.mxu0 %v747
        %1419 = vmatpush.msra.mxu0 %v743
        %1420 = vmatpush.msra.mxu0 %v739
        %1421 = vmatpush.msra.mxu0 %v735
        %1422 = vmatpush.msra.mxu0 %v731
        %1423 = vmatpush.msra.mxu0 %v727
        %1424 = vmatpush.msra.mxu0 %v723
        %1425 = vmatpush.msra.mxu0 %v719
        %1426 = vmatpush.msra.mxu0 %v715
        %1427 = vmatpush.msra.mxu0 %v711
        %1428 = vmatpush.msra.mxu0 %v707
        %1429 = vmatpush.msra.mxu0 %v703
        %1430 = vmatpush.msra.mxu0 %v699
        %1431 = vmatpush.msra.mxu0 %v695
        %1432 = vmatmul.f32.gmra.mxu0 %v1368
        %v1433 = vpop.f32.mrf.mxu0
        %v1434 = vadd.f32 0.0, %v1433
        %1435 = vdwg.mxu0
        %1436 = vmatpush.msra.mxu0 %v756
        %1437 = vmatpush.msra.mxu0 %v752
        %1438 = vmatpush.msra.mxu0 %v748
        %1439 = vmatpush.msra.mxu0 %v744
        %1440 = vmatpush.msra.mxu0 %v740
        %1441 = vmatpush.msra.mxu0 %v736
        %1442 = vmatpush.msra.mxu0 %v732
        %1443 = vmatpush.msra.mxu0 %v728
        %1444 = vmatpush.msra.mxu0 %v724
        %1445 = vmatpush.msra.mxu0 %v720
        %1446 = vmatpush.msra.mxu0 %v716
        %1447 = vmatpush.msra.mxu0 %v712
        %1448 = vmatpush.msra.mxu0 %v708
        %1449 = vmatpush.msra.mxu0 %v704
        %1450 = vmatpush.msra.mxu0 %v700
        %1451 = vmatpush.msra.mxu0 %v696
        %1452 = vmatmul.f32.gmra.mxu0 %v1368
        %v1453 = vpop.f32.mrf.mxu0
        %v1454 = vadd.f32 0.0, %v1453
        %1455 = vdwg.mxu0
        %v1456 = vadd.f32 %v1372, %v1394
        %v1457 = vadd.f32 %v1373, %v1414
        %v1458 = vadd.f32 %v1374, %v1434
        %v1459 = vadd.f32 %v1375, %v1454
        %v1460 = vxor.u32 %v1456, 2147483648
        %v1461 = vxor.u32 %v1457, 2147483648
        %v1462 = vxor.u32 %v1458, 2147483648
        %v1463 = vmul.f32 %v1460, 1.442695
        %v1464 = vpow.pop %v1463
        %v1465 = vmul.f32 %v1461, 1.442695
        %v1466 = vpow.pop %v1465
        %v1467 = vmul.f32 %v1462, 1.442695
        %v1468 = vpow.pop %v1467
        %v1469 = vadd.f32 %v1464, 1.0
        %v1470 = vadd.f32 %v1466, 1.0
        %v1471 = vadd.f32 %v1468, 1.0
        %v1472 = vrcp.pop %v1469
        %v1473 = vmul.f32 %v1469, %v1472
        %v1474 = vsub.f32 1.0, %v1473
        %v1475 = vmul.f32 %v1472, %v1474
        %v1476 = vadd.f32 %v1472, %v1475
        %vm1477 = vweird.f32 %v1469
        %vm1478 = vweird.f32 %v1472
        %vm1479 = vmor %vm1477, %vm1478
        %v1480 = vsel %vm1479, %v1472, %v1476
        %v1481 = vand.u32 2147483647, %v1469
        %vm1482 = vcmp.eq.f32.partialorder %v1481, 8.507059e+37
        %v1483 = vand.u32 %v1469, 2147483648
        %v1484 = vor.u32 1.1754944e-38, %v1483
        %v1485 = vsel %vm1482, %v1484, %v1480
        %v1486 = vmul.f32 1.0, %v1485
        %v1487 = vrcp.pop %v1470
        %v1488 = vmul.f32 %v1470, %v1487
        %v1489 = vsub.f32 1.0, %v1488
        %v1490 = vmul.f32 %v1487, %v1489
        %v1491 = vadd.f32 %v1487, %v1490
        %vm1492 = vweird.f32 %v1470
        %vm1493 = vweird.f32 %v1487
        %vm1494 = vmor %vm1492, %vm1493
        %v1495 = vsel %vm1494, %v1487, %v1491
        %v1496 = vand.u32 2147483647, %v1470
        %vm1497 = vcmp.eq.f32.partialorder %v1496, 8.507059e+37
        %v1498 = vand.u32 %v1470, 2147483648
        %v1499 = vor.u32 1.1754944e-38, %v1498
        %v1500 = vsel %vm1497, %v1499, %v1495
        %v1501 = vmul.f32 1.0, %v1500
        %v1502 = vrcp.pop %v1471
        %v1503 = vmul.f32 %v1471, %v1502
        %v1504 = vsub.f32 1.0, %v1503
        %v1505 = vmul.f32 %v1502, %v1504
        %v1506 = vadd.f32 %v1502, %v1505
        %vm1507 = vweird.f32 %v1471
        %vm1508 = vweird.f32 %v1502
        %vm1509 = vmor %vm1507, %vm1508
        %v1510 = vsel %vm1509, %v1502, %v1506
        %v1511 = vand.u32 2147483647, %v1471
        %vm1512 = vcmp.eq.f32.partialorder %v1511, 8.507059e+37
        %v1513 = vand.u32 %v1471, 2147483648
        %v1514 = vor.u32 1.1754944e-38, %v1513
        %v1515 = vsel %vm1512, %v1514, %v1510
        %v1516 = vmul.f32 1.0, %v1515
        %v1517 = vtanh.pop %v1459
        %v1518 = vmul.f32 %v1501, %v1366
        %v1519 = vmul.f32 %v1486, %v1517
        %v1520 = vadd.f32 %v1518, %v1519
        %v1521 = vtanh.pop %v1520
        %v1522 = vmul.f32 %v1516, %v1521
        %s1523 = scalar_lea.vmem [#allocation2], 32
        %1524 = vst [vmem:[%s1523] sm:$0xff] %v1522
        %s1525 = scalar_lea.vmem [#allocation3], 160
        %v1526 = vld [vmem:[%s1525] sm:$0xff]
        %v1527 = vld [vmem:[%s1525 + $0x8] sm:$0xff]
        %v1528 = vld [vmem:[%s1525 + $0x10] sm:$0xff]
        %v1529 = vld [vmem:[%s1525 + $0x18] sm:$0xff]
        %1530 = vmatpush.msra.mxu0 %v753
        %1531 = vmatpush.msra.mxu0 %v749
        %1532 = vmatpush.msra.mxu0 %v745
        %1533 = vmatpush.msra.mxu0 %v741
        %1534 = vmatpush.msra.mxu0 %v737
        %1535 = vmatpush.msra.mxu0 %v733
        %1536 = vmatpush.msra.mxu0 %v729
        %1537 = vmatpush.msra.mxu0 %v725
        %1538 = vmatpush.msra.mxu0 %v721
        %1539 = vmatpush.msra.mxu0 %v717
        %1540 = vmatpush.msra.mxu0 %v713
        %1541 = vmatpush.msra.mxu0 %v709
        %1542 = vmatpush.msra.mxu0 %v705
        %1543 = vmatpush.msra.mxu0 %v701
        %1544 = vmatpush.msra.mxu0 %v697
        %1545 = vmatpush.msra.mxu0 %v693
        %1546 = vmatmul.f32.gmra.mxu0 %v1522
        %v1547 = vpop.f32.mrf.mxu0
        %v1548 = vadd.f32 0.0, %v1547
        %1549 = vdwg.mxu0
        %1550 = vmatpush.msra.mxu0 %v754
        %1551 = vmatpush.msra.mxu0 %v750
        %1552 = vmatpush.msra.mxu0 %v746
        %1553 = vmatpush.msra.mxu0 %v742
        %1554 = vmatpush.msra.mxu0 %v738
        %1555 = vmatpush.msra.mxu0 %v734
        %1556 = vmatpush.msra.mxu0 %v730
        %1557 = vmatpush.msra.mxu0 %v726
        %1558 = vmatpush.msra.mxu0 %v722
        %1559 = vmatpush.msra.mxu0 %v718
        %1560 = vmatpush.msra.mxu0 %v714
        %1561 = vmatpush.msra.mxu0 %v710
        %1562 = vmatpush.msra.mxu0 %v706
        %1563 = vmatpush.msra.mxu0 %v702
        %1564 = vmatpush.msra.mxu0 %v698
        %1565 = vmatpush.msra.mxu0 %v694
        %1566 = vmatmul.f32.gmra.mxu0 %v1522
        %v1567 = vpop.f32.mrf.mxu0
        %v1568 = vadd.f32 0.0, %v1567
        %1569 = vdwg.mxu0
        %1570 = vmatpush.msra.mxu0 %v755
        %1571 = vmatpush.msra.mxu0 %v751
        %1572 = vmatpush.msra.mxu0 %v747
        %1573 = vmatpush.msra.mxu0 %v743
        %1574 = vmatpush.msra.mxu0 %v739
        %1575 = vmatpush.msra.mxu0 %v735
        %1576 = vmatpush.msra.mxu0 %v731
        %1577 = vmatpush.msra.mxu0 %v727
        %1578 = vmatpush.msra.mxu0 %v723
        %1579 = vmatpush.msra.mxu0 %v719
        %1580 = vmatpush.msra.mxu0 %v715
        %1581 = vmatpush.msra.mxu0 %v711
        %1582 = vmatpush.msra.mxu0 %v707
        %1583 = vmatpush.msra.mxu0 %v703
        %1584 = vmatpush.msra.mxu0 %v699
        %1585 = vmatpush.msra.mxu0 %v695
        %1586 = vmatmul.f32.gmra.mxu0 %v1522
        %v1587 = vpop.f32.mrf.mxu0
        %v1588 = vadd.f32 0.0, %v1587
        %1589 = vdwg.mxu0
        %1590 = vmatpush.msra.mxu0 %v756
        %1591 = vmatpush.msra.mxu0 %v752
        %1592 = vmatpush.msra.mxu0 %v748
        %1593 = vmatpush.msra.mxu0 %v744
        %1594 = vmatpush.msra.mxu0 %v740
        %1595 = vmatpush.msra.mxu0 %v736
        %1596 = vmatpush.msra.mxu0 %v732
        %1597 = vmatpush.msra.mxu0 %v728
        %1598 = vmatpush.msra.mxu0 %v724
        %1599 = vmatpush.msra.mxu0 %v720
        %1600 = vmatpush.msra.mxu0 %v716
        %1601 = vmatpush.msra.mxu0 %v712
        %1602 = vmatpush.msra.mxu0 %v708
        %1603 = vmatpush.msra.mxu0 %v704
        %1604 = vmatpush.msra.mxu0 %v700
        %1605 = vmatpush.msra.mxu0 %v696
        %1606 = vmatmul.f32.gmra.mxu0 %v1522
        %v1607 = vpop.f32.mrf.mxu0
        %v1608 = vadd.f32 0.0, %v1607
        %1609 = vdwg.mxu0
        %v1610 = vadd.f32 %v1526, %v1548
        %v1611 = vadd.f32 %v1527, %v1568
        %v1612 = vadd.f32 %v1528, %v1588
        %v1613 = vadd.f32 %v1529, %v1608
        %v1614 = vxor.u32 %v1610, 2147483648
        %v1615 = vxor.u32 %v1611, 2147483648
        %v1616 = vxor.u32 %v1612, 2147483648
        %v1617 = vmul.f32 %v1614, 1.442695
        %v1618 = vpow.pop %v1617
        %v1619 = vmul.f32 %v1615, 1.442695
        %v1620 = vpow.pop %v1619
        %v1621 = vmul.f32 %v1616, 1.442695
        %v1622 = vpow.pop %v1621
        %v1623 = vadd.f32 %v1618, 1.0
        %v1624 = vadd.f32 %v1620, 1.0
        %v1625 = vadd.f32 %v1622, 1.0
        %v1626 = vrcp.pop %v1623
        %v1627 = vmul.f32 %v1623, %v1626
        %v1628 = vsub.f32 1.0, %v1627
        %v1629 = vmul.f32 %v1626, %v1628
        %v1630 = vadd.f32 %v1626, %v1629
        %vm1631 = vweird.f32 %v1623
        %vm1632 = vweird.f32 %v1626
        %vm1633 = vmor %vm1631, %vm1632
        %v1634 = vsel %vm1633, %v1626, %v1630
        %v1635 = vand.u32 2147483647, %v1623
        %vm1636 = vcmp.eq.f32.partialorder %v1635, 8.507059e+37
        %v1637 = vand.u32 %v1623, 2147483648
        %v1638 = vor.u32 1.1754944e-38, %v1637
        %v1639 = vsel %vm1636, %v1638, %v1634
        %v1640 = vmul.f32 1.0, %v1639
        %v1641 = vrcp.pop %v1624
        %v1642 = vmul.f32 %v1624, %v1641
        %v1643 = vsub.f32 1.0, %v1642
        %v1644 = vmul.f32 %v1641, %v1643
        %v1645 = vadd.f32 %v1641, %v1644
        %vm1646 = vweird.f32 %v1624
        %vm1647 = vweird.f32 %v1641
        %vm1648 = vmor %vm1646, %vm1647
        %v1649 = vsel %vm1648, %v1641, %v1645
        %v1650 = vand.u32 2147483647, %v1624
        %vm1651 = vcmp.eq.f32.partialorder %v1650, 8.507059e+37
        %v1652 = vand.u32 %v1624, 2147483648
        %v1653 = vor.u32 1.1754944e-38, %v1652
        %v1654 = vsel %vm1651, %v1653, %v1649
        %v1655 = vmul.f32 1.0, %v1654
        %v1656 = vrcp.pop %v1625
        %v1657 = vmul.f32 %v1625, %v1656
        %v1658 = vsub.f32 1.0, %v1657
        %v1659 = vmul.f32 %v1656, %v1658
        %v1660 = vadd.f32 %v1656, %v1659
        %vm1661 = vweird.f32 %v1625
        %vm1662 = vweird.f32 %v1656
        %vm1663 = vmor %vm1661, %vm1662
        %v1664 = vsel %vm1663, %v1656, %v1660
        %v1665 = vand.u32 2147483647, %v1625
        %vm1666 = vcmp.eq.f32.partialorder %v1665, 8.507059e+37
        %v1667 = vand.u32 %v1625, 2147483648
        %v1668 = vor.u32 1.1754944e-38, %v1667
        %v1669 = vsel %vm1666, %v1668, %v1664
        %v1670 = vmul.f32 1.0, %v1669
        %v1671 = vtanh.pop %v1613
        %v1672 = vmul.f32 %v1655, %v1520
        %v1673 = vmul.f32 %v1640, %v1671
        %v1674 = vadd.f32 %v1672, %v1673
        %v1675 = vtanh.pop %v1674
        %v1676 = vmul.f32 %v1670, %v1675
        %s1677 = scalar_lea.vmem [#allocation2], 40
        %1678 = vst [vmem:[%s1677] sm:$0xff] %v1676
        %s1679 = scalar_lea.vmem [#allocation3], 192
        %v1680 = vld [vmem:[%s1679] sm:$0xff]
        %v1681 = vld [vmem:[%s1679 + $0x8] sm:$0xff]
        %v1682 = vld [vmem:[%s1679 + $0x10] sm:$0xff]
        %v1683 = vld [vmem:[%s1679 + $0x18] sm:$0xff]
        %1684 = vmatpush.msra.mxu0 %v753
        %1685 = vmatpush.msra.mxu0 %v749
        %1686 = vmatpush.msra.mxu0 %v745
        %1687 = vmatpush.msra.mxu0 %v741
        %1688 = vmatpush.msra.mxu0 %v737
        %1689 = vmatpush.msra.mxu0 %v733
        %1690 = vmatpush.msra.mxu0 %v729
        %1691 = vmatpush.msra.mxu0 %v725
        %1692 = vmatpush.msra.mxu0 %v721
        %1693 = vmatpush.msra.mxu0 %v717
        %1694 = vmatpush.msra.mxu0 %v713
        %1695 = vmatpush.msra.mxu0 %v709
        %1696 = vmatpush.msra.mxu0 %v705
        %1697 = vmatpush.msra.mxu0 %v701
        %1698 = vmatpush.msra.mxu0 %v697
        %1699 = vmatpush.msra.mxu0 %v693
        %1700 = vmatmul.f32.gmra.mxu0 %v1676
        %v1701 = vpop.f32.mrf.mxu0
        %v1702 = vadd.f32 0.0, %v1701
        %1703 = vdwg.mxu0
        %1704 = vmatpush.msra.mxu0 %v754
        %1705 = vmatpush.msra.mxu0 %v750
        %1706 = vmatpush.msra.mxu0 %v746
        %1707 = vmatpush.msra.mxu0 %v742
        %1708 = vmatpush.msra.mxu0 %v738
        %1709 = vmatpush.msra.mxu0 %v734
        %1710 = vmatpush.msra.mxu0 %v730
        %1711 = vmatpush.msra.mxu0 %v726
        %1712 = vmatpush.msra.mxu0 %v722
        %1713 = vmatpush.msra.mxu0 %v718
        %1714 = vmatpush.msra.mxu0 %v714
        %1715 = vmatpush.msra.mxu0 %v710
        %1716 = vmatpush.msra.mxu0 %v706
        %1717 = vmatpush.msra.mxu0 %v702
        %1718 = vmatpush.msra.mxu0 %v698
        %1719 = vmatpush.msra.mxu0 %v694
        %1720 = vmatmul.f32.gmra.mxu0 %v1676
        %v1721 = vpop.f32.mrf.mxu0
        %v1722 = vadd.f32 0.0, %v1721
        %1723 = vdwg.mxu0
        %1724 = vmatpush.msra.mxu0 %v755
        %1725 = vmatpush.msra.mxu0 %v751
        %1726 = vmatpush.msra.mxu0 %v747
        %1727 = vmatpush.msra.mxu0 %v743
        %1728 = vmatpush.msra.mxu0 %v739
        %1729 = vmatpush.msra.mxu0 %v735
        %1730 = vmatpush.msra.mxu0 %v731
        %1731 = vmatpush.msra.mxu0 %v727
        %1732 = vmatpush.msra.mxu0 %v723
        %1733 = vmatpush.msra.mxu0 %v719
        %1734 = vmatpush.msra.mxu0 %v715
        %1735 = vmatpush.msra.mxu0 %v711
        %1736 = vmatpush.msra.mxu0 %v707
        %1737 = vmatpush.msra.mxu0 %v703
        %1738 = vmatpush.msra.mxu0 %v699
        %1739 = vmatpush.msra.mxu0 %v695
        %1740 = vmatmul.f32.gmra.mxu0 %v1676
        %v1741 = vpop.f32.mrf.mxu0
        %v1742 = vadd.f32 0.0, %v1741
        %1743 = vdwg.mxu0
        %1744 = vmatpush.msra.mxu0 %v756
        %1745 = vmatpush.msra.mxu0 %v752
        %1746 = vmatpush.msra.mxu0 %v748
        %1747 = vmatpush.msra.mxu0 %v744
        %1748 = vmatpush.msra.mxu0 %v740
        %1749 = vmatpush.msra.mxu0 %v736
        %1750 = vmatpush.msra.mxu0 %v732
        %1751 = vmatpush.msra.mxu0 %v728
        %1752 = vmatpush.msra.mxu0 %v724
        %1753 = vmatpush.msra.mxu0 %v720
        %1754 = vmatpush.msra.mxu0 %v716
        %1755 = vmatpush.msra.mxu0 %v712
        %1756 = vmatpush.msra.mxu0 %v708
        %1757 = vmatpush.msra.mxu0 %v704
        %1758 = vmatpush.msra.mxu0 %v700
        %1759 = vmatpush.msra.mxu0 %v696
        %1760 = vmatmul.f32.gmra.mxu0 %v1676
        %v1761 = vpop.f32.mrf.mxu0
        %v1762 = vadd.f32 0.0, %v1761
        %1763 = vdwg.mxu0
        %v1764 = vadd.f32 %v1680, %v1702
        %v1765 = vadd.f32 %v1681, %v1722
        %v1766 = vadd.f32 %v1682, %v1742
        %v1767 = vadd.f32 %v1683, %v1762
        %v1768 = vxor.u32 %v1764, 2147483648
        %v1769 = vxor.u32 %v1765, 2147483648
        %v1770 = vxor.u32 %v1766, 2147483648
        %v1771 = vmul.f32 %v1768, 1.442695
        %v1772 = vpow.pop %v1771
        %v1773 = vmul.f32 %v1769, 1.442695
        %v1774 = vpow.pop %v1773
        %v1775 = vmul.f32 %v1770, 1.442695
        %v1776 = vpow.pop %v1775
        %v1777 = vadd.f32 %v1772, 1.0
        %v1778 = vadd.f32 %v1774, 1.0
        %v1779 = vadd.f32 %v1776, 1.0
        %v1780 = vrcp.pop %v1777
        %v1781 = vmul.f32 %v1777, %v1780
        %v1782 = vsub.f32 1.0, %v1781
        %v1783 = vmul.f32 %v1780, %v1782
        %v1784 = vadd.f32 %v1780, %v1783
        %vm1785 = vweird.f32 %v1777
        %vm1786 = vweird.f32 %v1780
        %vm1787 = vmor %vm1785, %vm1786
        %v1788 = vsel %vm1787, %v1780, %v1784
        %v1789 = vand.u32 2147483647, %v1777
        %vm1790 = vcmp.eq.f32.partialorder %v1789, 8.507059e+37
        %v1791 = vand.u32 %v1777, 2147483648
        %v1792 = vor.u32 1.1754944e-38, %v1791
        %v1793 = vsel %vm1790, %v1792, %v1788
        %v1794 = vmul.f32 1.0, %v1793
        %v1795 = vrcp.pop %v1778
        %v1796 = vmul.f32 %v1778, %v1795
        %v1797 = vsub.f32 1.0, %v1796
        %v1798 = vmul.f32 %v1795, %v1797
        %v1799 = vadd.f32 %v1795, %v1798
        %vm1800 = vweird.f32 %v1778
        %vm1801 = vweird.f32 %v1795
        %vm1802 = vmor %vm1800, %vm1801
        %v1803 = vsel %vm1802, %v1795, %v1799
        %v1804 = vand.u32 2147483647, %v1778
        %vm1805 = vcmp.eq.f32.partialorder %v1804, 8.507059e+37
        %v1806 = vand.u32 %v1778, 2147483648
        %v1807 = vor.u32 1.1754944e-38, %v1806
        %v1808 = vsel %vm1805, %v1807, %v1803
        %v1809 = vmul.f32 1.0, %v1808
        %v1810 = vrcp.pop %v1779
        %v1811 = vmul.f32 %v1779, %v1810
        %v1812 = vsub.f32 1.0, %v1811
        %v1813 = vmul.f32 %v1810, %v1812
        %v1814 = vadd.f32 %v1810, %v1813
        %vm1815 = vweird.f32 %v1779
        %vm1816 = vweird.f32 %v1810
        %vm1817 = vmor %vm1815, %vm1816
        %v1818 = vsel %vm1817, %v1810, %v1814
        %v1819 = vand.u32 2147483647, %v1779
        %vm1820 = vcmp.eq.f32.partialorder %v1819, 8.507059e+37
        %v1821 = vand.u32 %v1779, 2147483648
        %v1822 = vor.u32 1.1754944e-38, %v1821
        %v1823 = vsel %vm1820, %v1822, %v1818
        %v1824 = vmul.f32 1.0, %v1823
        %v1825 = vtanh.pop %v1767
        %v1826 = vmul.f32 %v1809, %v1674
        %v1827 = vmul.f32 %v1794, %v1825
        %v1828 = vadd.f32 %v1826, %v1827
        %v1829 = vtanh.pop %v1828
        %v1830 = vmul.f32 %v1824, %v1829
        %s1831 = scalar_lea.vmem [#allocation2], 48
        %1832 = vst [vmem:[%s1831] sm:$0xff] %v1830
        %s1833 = scalar_lea.vmem [#allocation3], 224
        %v1834 = vld [vmem:[%s1833] sm:$0xff]
        %v1835 = vld [vmem:[%s1833 + $0x8] sm:$0xff]
        %v1836 = vld [vmem:[%s1833 + $0x10] sm:$0xff]
        %v1837 = vld [vmem:[%s1833 + $0x18] sm:$0xff]
        %1838 = vmatpush.msra.mxu0 %v753
        %1839 = vmatpush.msra.mxu0 %v749
        %1840 = vmatpush.msra.mxu0 %v745
        %1841 = vmatpush.msra.mxu0 %v741
        %1842 = vmatpush.msra.mxu0 %v737
        %1843 = vmatpush.msra.mxu0 %v733
        %1844 = vmatpush.msra.mxu0 %v729
        %1845 = vmatpush.msra.mxu0 %v725
        %1846 = vmatpush.msra.mxu0 %v721
        %1847 = vmatpush.msra.mxu0 %v717
        %1848 = vmatpush.msra.mxu0 %v713
        %1849 = vmatpush.msra.mxu0 %v709
        %1850 = vmatpush.msra.mxu0 %v705
        %1851 = vmatpush.msra.mxu0 %v701
        %1852 = vmatpush.msra.mxu0 %v697
        %1853 = vmatpush.msra.mxu0 %v693
        %1854 = vmatmul.f32.gmra.mxu0 %v1830
        %v1855 = vpop.f32.mrf.mxu0
        %v1856 = vadd.f32 0.0, %v1855
        %1857 = vdwg.mxu0
        %1858 = vmatpush.msra.mxu0 %v754
        %1859 = vmatpush.msra.mxu0 %v750
        %1860 = vmatpush.msra.mxu0 %v746
        %1861 = vmatpush.msra.mxu0 %v742
        %1862 = vmatpush.msra.mxu0 %v738
        %1863 = vmatpush.msra.mxu0 %v734
        %1864 = vmatpush.msra.mxu0 %v730
        %1865 = vmatpush.msra.mxu0 %v726
        %1866 = vmatpush.msra.mxu0 %v722
        %1867 = vmatpush.msra.mxu0 %v718
        %1868 = vmatpush.msra.mxu0 %v714
        %1869 = vmatpush.msra.mxu0 %v710
        %1870 = vmatpush.msra.mxu0 %v706
        %1871 = vmatpush.msra.mxu0 %v702
        %1872 = vmatpush.msra.mxu0 %v698
        %1873 = vmatpush.msra.mxu0 %v694
        %1874 = vmatmul.f32.gmra.mxu0 %v1830
        %v1875 = vpop.f32.mrf.mxu0
        %v1876 = vadd.f32 0.0, %v1875
        %1877 = vdwg.mxu0
        %1878 = vmatpush.msra.mxu0 %v755
        %1879 = vmatpush.msra.mxu0 %v751
        %1880 = vmatpush.msra.mxu0 %v747
        %1881 = vmatpush.msra.mxu0 %v743
        %1882 = vmatpush.msra.mxu0 %v739
        %1883 = vmatpush.msra.mxu0 %v735
        %1884 = vmatpush.msra.mxu0 %v731
        %1885 = vmatpush.msra.mxu0 %v727
        %1886 = vmatpush.msra.mxu0 %v723
        %1887 = vmatpush.msra.mxu0 %v719
        %1888 = vmatpush.msra.mxu0 %v715
        %1889 = vmatpush.msra.mxu0 %v711
        %1890 = vmatpush.msra.mxu0 %v707
        %1891 = vmatpush.msra.mxu0 %v703
        %1892 = vmatpush.msra.mxu0 %v699
        %1893 = vmatpush.msra.mxu0 %v695
        %1894 = vmatmul.f32.gmra.mxu0 %v1830
        %v1895 = vpop.f32.mrf.mxu0
        %v1896 = vadd.f32 0.0, %v1895
        %1897 = vdwg.mxu0
        %1898 = vmatpush.msra.mxu0 %v756
        %1899 = vmatpush.msra.mxu0 %v752
        %1900 = vmatpush.msra.mxu0 %v748
        %1901 = vmatpush.msra.mxu0 %v744
        %1902 = vmatpush.msra.mxu0 %v740
        %1903 = vmatpush.msra.mxu0 %v736
        %1904 = vmatpush.msra.mxu0 %v732
        %1905 = vmatpush.msra.mxu0 %v728
        %1906 = vmatpush.msra.mxu0 %v724
        %1907 = vmatpush.msra.mxu0 %v720
        %1908 = vmatpush.msra.mxu0 %v716
        %1909 = vmatpush.msra.mxu0 %v712
        %1910 = vmatpush.msra.mxu0 %v708
        %1911 = vmatpush.msra.mxu0 %v704
        %1912 = vmatpush.msra.mxu0 %v700
        %1913 = vmatpush.msra.mxu0 %v696
        %1914 = vmatmul.f32.gmra.mxu0 %v1830
        %v1915 = vpop.f32.mrf.mxu0
        %v1916 = vadd.f32 0.0, %v1915
        %1917 = vdwg.mxu0
        %v1918 = vadd.f32 %v1834, %v1856
        %v1919 = vadd.f32 %v1835, %v1876
        %v1920 = vadd.f32 %v1836, %v1896
        %v1921 = vadd.f32 %v1837, %v1916
        %v1922 = vxor.u32 %v1918, 2147483648
        %v1923 = vxor.u32 %v1919, 2147483648
        %v1924 = vxor.u32 %v1920, 2147483648
        %v1925 = vmul.f32 %v1922, 1.442695
        %v1926 = vpow.pop %v1925
        %v1927 = vmul.f32 %v1923, 1.442695
        %v1928 = vpow.pop %v1927
        %v1929 = vmul.f32 %v1924, 1.442695
        %v1930 = vpow.pop %v1929
        %v1931 = vadd.f32 %v1926, 1.0
        %v1932 = vadd.f32 %v1928, 1.0
        %v1933 = vadd.f32 %v1930, 1.0
        %v1934 = vrcp.pop %v1931
        %v1935 = vmul.f32 %v1931, %v1934
        %v1936 = vsub.f32 1.0, %v1935
        %v1937 = vmul.f32 %v1934, %v1936
        %v1938 = vadd.f32 %v1934, %v1937
        %vm1939 = vweird.f32 %v1931
        %vm1940 = vweird.f32 %v1934
        %vm1941 = vmor %vm1939, %vm1940
        %v1942 = vsel %vm1941, %v1934, %v1938
        %v1943 = vand.u32 2147483647, %v1931
        %vm1944 = vcmp.eq.f32.partialorder %v1943, 8.507059e+37
        %v1945 = vand.u32 %v1931, 2147483648
        %v1946 = vor.u32 1.1754944e-38, %v1945
        %v1947 = vsel %vm1944, %v1946, %v1942
        %v1948 = vmul.f32 1.0, %v1947
        %v1949 = vrcp.pop %v1932
        %v1950 = vmul.f32 %v1932, %v1949
        %v1951 = vsub.f32 1.0, %v1950
        %v1952 = vmul.f32 %v1949, %v1951
        %v1953 = vadd.f32 %v1949, %v1952
        %vm1954 = vweird.f32 %v1932
        %vm1955 = vweird.f32 %v1949
        %vm1956 = vmor %vm1954, %vm1955
        %v1957 = vsel %vm1956, %v1949, %v1953
        %v1958 = vand.u32 2147483647, %v1932
        %vm1959 = vcmp.eq.f32.partialorder %v1958, 8.507059e+37
        %v1960 = vand.u32 %v1932, 2147483648
        %v1961 = vor.u32 1.1754944e-38, %v1960
        %v1962 = vsel %vm1959, %v1961, %v1957
        %v1963 = vmul.f32 1.0, %v1962
        %v1964 = vrcp.pop %v1933
        %v1965 = vmul.f32 %v1933, %v1964
        %v1966 = vsub.f32 1.0, %v1965
        %v1967 = vmul.f32 %v1964, %v1966
        %v1968 = vadd.f32 %v1964, %v1967
        %vm1969 = vweird.f32 %v1933
        %vm1970 = vweird.f32 %v1964
        %vm1971 = vmor %vm1969, %vm1970
        %v1972 = vsel %vm1971, %v1964, %v1968
        %v1973 = vand.u32 2147483647, %v1933
        %vm1974 = vcmp.eq.f32.partialorder %v1973, 8.507059e+37
        %v1975 = vand.u32 %v1933, 2147483648
        %v1976 = vor.u32 1.1754944e-38, %v1975
        %v1977 = vsel %vm1974, %v1976, %v1972
        %v1978 = vmul.f32 1.0, %v1977
        %v1979 = vtanh.pop %v1921
        %v1980 = vmul.f32 %v1963, %v1828
        %v1981 = vmul.f32 %v1948, %v1979
        %v1982 = vadd.f32 %v1980, %v1981
        %v1983 = vtanh.pop %v1982
        %v1984 = vmul.f32 %v1978, %v1983
        %s1985 = scalar_lea.vmem [#allocation2], 56
        %1986 = vst [vmem:[%s1985] sm:$0xff] %v1984
        %p1987 = scmp.eq.s32.totalorder %s30, 1
        // Predicated region
        $region69: #{tpu_custom_call.1} parent=43 // pred_check
          %p1988 = pneg %p1987
        $region70: #{tpu_custom_call.1} parent=43 // pred_check_branch
          %1990 = sbr.rel (%p1988) target = $region72
        $region71: #{tpu_custom_call.1} parent=43 // pred_region
          %v1991 = vld [vmem:[#allocation12] sm:$0xff]
          %v1992 = vld [vmem:[#allocation12 + $0x8] sm:$0xff]
          %v1993 = vld [vmem:[#allocation12 + $0x10] sm:$0xff]
          %v1994 = vld [vmem:[#allocation12 + $0x18] sm:$0xff]
          %v1995 = vld [vmem:[#allocation12 + $0x20] sm:$0xff]
          %v1996 = vld [vmem:[#allocation12 + $0x28] sm:$0xff]
          %v1997 = vld [vmem:[#allocation12 + $0x30] sm:$0xff]
          %v1998 = vld [vmem:[#allocation12 + $0x38] sm:$0xff]
          %v1999 = vld [vmem:[#allocation12 + $0x40] sm:$0xff]
          %v2000 = vld [vmem:[#allocation12 + $0x48] sm:$0xff]
          %v2001 = vld [vmem:[#allocation12 + $0x50] sm:$0xff]
          %v2002 = vld [vmem:[#allocation12 + $0x58] sm:$0xff]
          %v2003 = vld [vmem:[#allocation12 + $0x60] sm:$0xff]
          %v2004 = vld [vmem:[#allocation12 + $0x68] sm:$0xff]
          %v2005 = vld [vmem:[#allocation12 + $0x70] sm:$0xff]
          %v2006 = vld [vmem:[#allocation12 + $0x78] sm:$0xff]
          %v2007 = vld [vmem:[%s5] sm:$0x1]
          %v2009 = vperm.slane %v2007, 0
          %2011 = vmatpush.msra.mxu0 %v2006
          %2012 = vmatpush.msra.mxu0 %v2005
          %2013 = vmatpush.msra.mxu0 %v2004
          %2014 = vmatpush.msra.mxu0 %v2003
          %2015 = vmatpush.msra.mxu0 %v2002
          %2016 = vmatpush.msra.mxu0 %v2001
          %2017 = vmatpush.msra.mxu0 %v2000
          %2018 = vmatpush.msra.mxu0 %v1999
          %2019 = vmatpush.msra.mxu0 %v1998
          %2020 = vmatpush.msra.mxu0 %v1997
          %2021 = vmatpush.msra.mxu0 %v1996
          %2022 = vmatpush.msra.mxu0 %v1995
          %2023 = vmatpush.msra.mxu0 %v1994
          %2024 = vmatpush.msra.mxu0 %v1993
          %2025 = vmatpush.msra.mxu0 %v1992
          %2026 = vmatpush.msra.mxu0 %v1991
          %2027 = vmatmul.f32.gmra.mxu0 %v1984
          %v2028 = vpop.f32.mrf.mxu0
          %v2029 = vadd.f32 %v2009, %v2028
          %2030 = vdwg.mxu0
          %2031 = vst [vmem:[#allocation13] sm:$0xff] %v2029
        $region72: #{tpu_custom_call.1} parent=43 // pred_fallthru
          _
        // Predicated region
        $region73: #{tpu_custom_call.1} parent=43 // pred_check
          %p2032 = pneg %p201
        $region74: #{tpu_custom_call.1} parent=43 // pred_check_branch
          %2034 = sbr.rel (%p2032) target = $region76
        $region75: #{tpu_custom_call.1} parent=43 // pred_region
          %2036 = vsyncadd [#allocation6], 0
          %s2037 = smul.addr %s29, 8
          %s2038 = scalar_lea.hbm %s6, %s2037
          %s2040 = sshll.u32 [#allocation13], 4
          %s2041 = int_to_ptr.vmem [resolvable:$true] %s2040
          %s2042 = sshll.u32 %s2038, 4
          %s2043 = int_to_ptr.hbm [resolvable:$true] %s2042
          %2045 = dma.vmem_to_hbm [thread:$0]  %s2041, 128, %s2043, [#allocation6]
        $region76: #{tpu_custom_call.1} parent=43 // pred_fallthru
          _
        // Predicated region
        $region77: #{tpu_custom_call.1} parent=43 // pred_check
          %p2046 = pneg %p201
        $region78: #{tpu_custom_call.1} parent=43 // pred_check_branch
          %2048 = sbr.rel (%p2046) target = $region80
        $region79: #{tpu_custom_call.1} parent=43 // pred_region
          %2050 = dma.done [#allocation6], 128
        $region80: #{tpu_custom_call.1} parent=43 // pred_fallthru
          _
      $region44: #{tpu_custom_call.1} parent=5 // pred_fallthru
        _
      %p2051 = scmp.le.s32.totalorder 2, %s20
      // Predicated region
      $region81: #{tpu_custom_call.1} parent=5 // pred_check
        %p2052 = pneg %p2051
      $region82: #{tpu_custom_call.1} parent=5 // pred_check_branch
        %2054 = sbr.rel (%p2052) target = $region84
      $region83: #{tpu_custom_call.1} parent=5 // pred_region
        %s2055 = ssub.s32 %s20, 2
      $region84: #{tpu_custom_call.1} parent=5 // pred_fallthru
        _
    $region6: #{tpu_custom_call.1} parent=1 // loop_footer
      %s24 = sadd.s32 1, %s20
    $region7: #{tpu_custom_call.1} parent=1 // loop_footer_branch
      %19 = sbr.rel target = $region3
    $region8: #{tpu_custom_call.1} parent=1 // loop_exit
      _
    %2056 = vsyncpa [#allocation5], 1
    %s2057 = scalar_lea.sflag [#allocation5], 1
    %2058 = vsyncpa %s2057, 1
    %2059 = vsyncpa [#allocation8], 1
    %s2060 = scalar_lea.sflag [#allocation8], 1
    %2061 = vsyncpa %s2060, 1
    %2062 = vsyncpa [#allocation11], 1
    %s2063 = scalar_lea.sflag [#allocation11], 1
    %2064 = vsyncpa %s2063, 1
    %2065 = vsyncpa [#allocation6], 1
    %s2066 = scalar_lea.sflag [#allocation6], 1
    %2067 = vsyncpa %s2066, 1

</llo_original>
